<compile_context>
chip_gen: v5e
topology: v5e:2x2
jax: 0.10.0
libtpu: 0.0.40
codegen_flags: <defaults>
</compile_context>

<pallas_src>
import math
import functools

import jax
import jax.numpy as jnp
from jax.experimental import pallas as pl
from jax.experimental.pallas import tpu as pltpu


def _pick_q_tile(M, target):
    """Largest multiple-of-8 divisor of M that is <= target, else full M."""
    target = max(8, (int(target) // 8) * 8)
    if M <= target:
        return M
    for t in range(target, 7, -8):
        if M % t == 0:
            return t
    return M


# ---------------------------------------------------------------------------
# Pallas kernel
# ---------------------------------------------------------------------------
def _deformable_mha_kernel(
    sl_ref, inv_sl_ref,                        # SMEM (B,) f32: sign_lens, 1/sign_lens
    k_ref, v_ref, q_ref,                       # VMEM (1,L,D), (1,L,D), (1,tm,D)
    wk_ref, bk_ref, wv_ref, bv_ref,            # (D,D) cdt, (1,D) f32
    wqo_ref, bqo_ref,                          # fused q|offset proj: (D,D+HK), (1,D+HK) f32
    wo_ref, bo_ref,                            # (D,D) cdt, (1,D) f32
    out_ref,                                   # (1,tm,D)
    kp_ref, vp_ref,                            # VMEM scratch (L,D) cdt, persists across q-tiles
    *, num_heads, num_keys,
):
    f32 = jnp.float32
    b = pl.program_id(0)
    t = pl.program_id(1)
    L = k_ref.shape[1]
    D = k_ref.shape[2]
    tm = q_ref.shape[1]
    hs = D // num_heads
    inv_sqrt_hs = 1.0 / math.sqrt(hs)
    # torch: s_norm = s/(L-1)*2 - 1 ; grid_sample ix = ((s_norm+1)*L - 1)/2
    # collapses to ix = s * L/(L-1) - 0.5.
    coord_scale = float(L) / float(L - 1) if L > 1 else 0.0  # module breaks for M == 1 anyway
    cdt = kp_ref.dtype

    # ---- per-batch K/V projections: once per batch, reused across q-tiles ----
    @pl.when(t == 0)
    def _():
        kp = jnp.dot(k_ref[0], wk_ref[...], preferred_element_type=f32) + bk_ref[...]
        vp = jnp.dot(v_ref[0], wv_ref[...], preferred_element_type=f32) + bv_ref[...]
        kp_ref[...] = kp.astype(cdt)
        vp_ref[...] = vp.astype(cdt)

    sl = sl_ref[b]                     # guarded (>= 1) in the wrapper
    inv_sl = inv_sl_ref[b]

    # ---- fused q / sampling-offset projection (kept f32: feeds floor/compares) ----
    qpo = jnp.dot(q_ref[0].astype(f32), wqo_ref[...],
                  preferred_element_type=f32) + bqo_ref[...]          # (tm, D+HK)
    qp = qpo[:, :D] * inv_sqrt_hs                                      # scaled queries
    offs = qpo[:, D:]                  # (tm, H*K); reference_point already in the bias

    # ---- sampling coordinates for all heads/keys at once (f32) ----
    loc = (jax.lax.broadcasted_iota(jnp.int32, (tm, 1), 0) + t * tm).astype(f32)
    s = offs + loc                                                     # (tm, H*K)
    s = s - jnp.floor(s * inv_sl) * sl                                 # float mod == torch %
    ix = s * coord_scale - 0.5
    ix0 = jnp.floor(ix)
    ix1 = ix0 + 1.0
    wx1 = 0.5 * (ix - ix0)            # 0.5 = grid_sample's y-weight on a height-1 input
    wx0 = 0.5 - wx1

    cols = jax.lax.broadcasted_iota(jnp.int32, (tm, L), 1).astype(f32)

    ctx_cols = []
    for h in range(num_heads):
        kp_h = kp_ref[:, h * hs:(h + 1) * hs]                          # (L, hs)
        vp_h = vp_ref[:, h * hs:(h + 1) * hs]
        q_h = qp[:, h * hs:(h + 1) * hs].astype(cdt)

        # logits-first: one lane-dense matmul per head (N = L).
        a_full = jnp.dot(q_h, kp_h.T, preferred_element_type=f32)      # (tm, L)

        # TODO(synk): the ix1 one-hot could reuse a pltpu.roll of the ix0
        # one-hot, but needs extra masking at ix0 == -1 / ix0 == L-1; kept as a
        # second compare to preserve exact grid_sample zero-padding semantics.
        w_list, score_cols = [], []
        for kk in range(num_keys):
            c = h * num_keys + kk
            w_k = (wx0[:, c:c + 1] * (cols == ix0[:, c:c + 1]).astype(f32)
                   + wx1[:, c:c + 1] * (cols == ix1[:, c:c + 1]).astype(f32))  # (tm, L)
            w_list.append(w_k)
            score_cols.append(jnp.sum(w_k * a_full, axis=-1, keepdims=True))
        scores = jnp.concatenate(score_cols, axis=-1)                  # (tm, K)

        m = jnp.max(scores, axis=-1, keepdims=True)
        p = jnp.exp(scores - m)
        attn = p * pl.reciprocal(jnp.sum(p, axis=-1, keepdims=True), approx=True)
        # TODO(synk): attention dropout (p=0.1) omitted — identity in eval mode.

        wc = attn[:, 0:1] * w_list[0]
        for kk in range(1, num_keys):
            wc = wc + attn[:, kk:kk + 1] * w_list[kk]
        ctx_cols.append(jnp.dot(wc.astype(cdt), vp_h, preferred_element_type=f32))

    ctx = jnp.concatenate(ctx_cols, axis=-1)                            # (tm, D), lane-dense
    out = jnp.dot(ctx.astype(cdt), wo_ref[...], preferred_element_type=f32) + bo_ref[...]
    out_ref[0] = out.astype(out_ref.dtype)


# ---------------------------------------------------------------------------
# Wrapper
# ---------------------------------------------------------------------------
def deformable_mha_forward(k, v, q, mask, params, *, num_heads, num_keys,
                           q_tile=128, compute_dtype=None, vmem_limit_mb=64):
    """k, v, q: (B, M, D); mask: (B, M) with 1 = padding. Returns (B, M, D)."""
    B, M, D = k.shape
    assert D % num_heads == 0
    HK = num_heads * num_keys
    f32 = jnp.float32
    cdt = jnp.dtype(compute_dtype) if compute_dtype is not None else q.dtype
    hi = jax.lax.Precision.HIGHEST

    # sign_lens = (1 - mask).sum(-1) - 1, guarded >= 1 so the in-kernel float
    # mod cannot divide by zero (the torch module itself NaNs in that case).
    sign_lens = (1.0 - mask.astype(f32)).sum(axis=-1) - 1.0
    sign_lens = jnp.maximum(sign_lens, 1.0)
    inv_sign_lens = 1.0 / sign_lens

    # Bulk matmul weights in the compute dtype (bf16-friendly); biases tiny f32.
    wk = params["wk"].astype(cdt)
    wv = params["wv"].astype(cdt)
    wo = params["wo"].astype(cdt)
    bk = params["bk"].reshape(1, D).astype(f32)
    bv = params["bv"].reshape(1, D).astype(f32)
    bo = params["bo"].reshape(1, D).astype(f32)

    # Fold the sampling-offset projection into the q projection:
    #   offsets(q) = (q@wq + bq)@woff + boff == q@(wq@woff) + (bq@woff + boff)
    # and bake reference_point into its bias. Kept f32: it feeds floor().
    wq = params["wq"].astype(f32)
    bq = params["bq"].astype(f32)
    woff = params["woff"].astype(f32)
    boff = params["boff"].astype(f32)
    left = -num_keys // 2
    ref_pts = jnp.tile(jnp.arange(left, left + num_keys, dtype=f32), num_heads)
    wqo = jnp.concatenate([wq, jnp.dot(wq, woff, precision=hi)], axis=1)      # (D, D+HK)
    bqo = jnp.concatenate(
        [bq, jnp.dot(bq, woff, precision=hi) + boff + ref_pts]).reshape(1, D + HK)

    tm = _pick_q_tile(M, q_tile)
    num_q_tiles = M // tm

    kernel = functools.partial(_deformable_mha_kernel,
                               num_heads=num_heads, num_keys=num_keys)

    kv_spec = pl.BlockSpec((1, M, D), lambda b, t: (b, 0, 0))   # invariant in q-tile axis
    q_spec = pl.BlockSpec((1, tm, D), lambda b, t: (b, t, 0))
    smem_spec = pl.BlockSpec(memory_space=pltpu.MemorySpace.SMEM)

    def w_spec(shape):
        return pl.BlockSpec(shape, lambda b, t: (0, 0))

    return pl.pallas_call(
        kernel,
        out_shape=jax.ShapeDtypeStruct((B, M, D), q.dtype),
        grid=(B, num_q_tiles),
        in_specs=[
            smem_spec, smem_spec,                               # sign_lens, 1/sign_lens
            kv_spec, kv_spec, q_spec,                           # k, v, q
            w_spec((D, D)), w_spec((1, D)),                     # Wk, bk
            w_spec((D, D)), w_spec((1, D)),                     # Wv, bv
            w_spec((D, D + HK)), w_spec((1, D + HK)),           # fused Wq|Woff, bias
            w_spec((D, D)), w_spec((1, D)),                     # Wo, bo
        ],
        out_specs=q_spec,
        scratch_shapes=[pltpu.VMEM((M, D), cdt),                # kp, reused across q-tiles
                        pltpu.VMEM((M, D), cdt)],               # vp
        compiler_params=pltpu.CompilerParams(
            # q-tile axis must stay sequential per batch (kp/vp scratch reuse);
            # batch axis is parallel for megacore / dual-TC chips.
            dimension_semantics=("parallel", "arbitrary"),
            vmem_limit_bytes=vmem_limit_mb * 1024 * 1024,
        ),
    )(sign_lens, inv_sign_lens, k, v, q, wk, bk, wv, bv, wqo, bqo, wo, bo)


# ---------------------------------------------------------------------------
# Pure-JAX reference (mirrors the torch module) for validation
# ---------------------------------------------------------------------------
def deformable_mha_reference(k, v, q, mask, params, *, num_heads, num_keys):
    with jax.default_matmul_precision("float32"):
        B, M, D = k.shape
        hs = D // num_heads
        L = M
        kp = k @ params["wk"] + params["bk"]
        vp = v @ params["wv"] + params["bv"]
        qp = q @ params["wq"] + params["bq"]
        offs = (qp @ params["woff"] + params["boff"]).reshape(B, M, num_heads, num_keys)
        offs = offs.transpose(0, 2, 1, 3)                           # (B,H,M,K)
        kh = kp.reshape(B, M, num_heads, hs).transpose(0, 2, 1, 3)  # (B,H,M,hs)
        vh = vp.reshape(B, M, num_heads, hs).transpose(0, 2, 1, 3)
        qh = qp.reshape(B, M, num_heads, hs).transpose(0, 2, 1, 3)

        loc = jnp.arange(M, dtype=jnp.float32)[:, None]             # (M,1)
        left = -num_keys // 2
        ref_pt = jnp.arange(left, left + num_keys, dtype=jnp.float32)
        sign_lens = (1.0 - mask.astype(jnp.float32)).sum(-1) - 1.0  # (B,)
        sl = sign_lens[:, None, None, None]

        s = ref_pt + offs + loc                                     # (B,H,M,K)
        s = s - jnp.floor(s / sl) * sl
        s_norm = s / (L - 1) * 2.0 - 1.0
        ix = ((s_norm + 1.0) * L - 1.0) * 0.5
        ix0 = jnp.floor(ix)
        ix1 = ix0 + 1.0
        wx1 = ix - ix0
        wx0 = 1.0 - wx1
        cols = jnp.arange(L, dtype=jnp.float32)
        W = 0.5 * (wx0[..., None] * (ix0[..., None] == cols).astype(jnp.float32)
                   + wx1[..., None] * (ix1[..., None] == cols).astype(jnp.float32))
        sk = jnp.einsum("bhmkl,bhlc->bhmkc", W, kh)
        sv = jnp.einsum("bhmkl,bhlc->bhmkc", W, vh)
        qs = qh / math.sqrt(hs)
        scores = jnp.einsum("bhmc,bhmkc->bhmk", qs, sk)
        attn = jax.nn.softmax(scores, axis=-1)
        ctx = jnp.einsum("bhmk,bhmkc->bhmc", attn, sv)
        ctx = ctx.transpose(0, 2, 1, 3).reshape(B, M, D)
        return ctx @ params["wo"] + params["bo"]


def _init_params(key, D, num_heads, num_keys):
    HK = num_heads * num_keys
    ks = jax.random.split(key, 10)
    s = 1.0 / math.sqrt(D)
    return {
        "wk": jax.random.normal(ks[0], (D, D), jnp.float32) * s,
        "bk": jax.random.normal(ks[1], (D,), jnp.float32) * s,
        "wv": jax.random.normal(ks[2], (D, D), jnp.float32) * s,
        "bv": jax.random.normal(ks[3], (D,), jnp.float32) * s,
        "wq": jax.random.normal(ks[4], (D, D), jnp.float32) * s,
        "bq": jax.random.normal(ks[5], (D,), jnp.float32) * s,
        "woff": jax.random.normal(ks[6], (D, HK), jnp.float32) * s,
        "boff": jax.random.normal(ks[7], (HK,), jnp.float32) * s,
        "wo": jax.random.normal(ks[8], (D, D), jnp.float32) * s,
        "bo": jax.random.normal(ks[9], (D,), jnp.float32) * s,
    }


if __name__ == "__main__":
    B, M, D = 2, 16, 32
    num_heads, num_keys = 4, 5

    root = jax.random.PRNGKey(0)
    kk_, kv_, kq_, kp_ = jax.random.split(root, 4)
    k = jax.random.normal(kk_, (B, M, D), jnp.float32)
    v = jax.random.normal(kv_, (B, M, D), jnp.float32)
    q = jax.random.normal(kq_, (B, M, D), jnp.float32)
    # Module computes (1 - mask).sum(-1) - 1, so 0 = real token, 1 = padding.
    mask = jnp.zeros((B, M), jnp.float32).at[1, 10:].set(1.0)

    params = _init_params(kp_, D, num_heads, num_keys)

    # f32 run; q_tile=8 exercises the multi-q-tile path (grid = (B, M // 8)).
    out = deformable_mha_forward(k, v, q, mask, params,
                                 num_heads=num_heads, num_keys=num_keys, q_tile=8)
    out = jax.block_until_ready(out)
    ref = deformable_mha_reference(k, v, q, mask, params,
                                   num_heads=num_heads, num_keys=num_keys)
    assert out.shape == (B, M, D)
    err = float(jnp.max(jnp.abs(out - ref)))
    assert jnp.allclose(out, ref, atol=1e-2, rtol=1e-2), f"f32 mismatch, max|diff|={err}"

    # bf16 run: inputs + bulk weights in bf16 (coordinate path stays f32).
    kb, vb, qb = (x.astype(jnp.bfloat16) for x in (k, v, q))
    out_bf = deformable_mha_forward(kb, vb, qb, mask, params,
                                    num_heads=num_heads, num_keys=num_keys, q_tile=8)
    out_bf = jax.block_until_ready(out_bf)
    ref_bf = deformable_mha_reference(kb.astype(jnp.float32), vb.astype(jnp.float32),
                                      qb.astype(jnp.float32), mask, params,
                                      num_heads=num_heads, num_keys=num_keys)
    err_bf = float(jnp.max(jnp.abs(out_bf.astype(jnp.float32) - ref_bf)))
    assert jnp.allclose(out_bf.astype(jnp.float32), ref_bf, atol=1e-1, rtol=1e-1), \
        f"bf16 mismatch, max|diff|={err_bf}"

    print("KERNEL_OK")
</pallas_src>

<mosaic_0001>
module attributes {stable_mosaic.version = 11 : i64} {
  func.func @_deformable_mha_kernel(%arg0: i32, %arg1: i32, %arg2: memref<2xf32, #tpu.memory_space<smem>>, %arg3: memref<2xf32, #tpu.memory_space<smem>>, %arg4: memref<1x16x32xf32, #tpu.memory_space<vmem>>, %arg5: memref<1x16x32xf32, #tpu.memory_space<vmem>>, %arg6: memref<1x8x32xf32, #tpu.memory_space<vmem>>, %arg7: memref<32x32xf32, #tpu.memory_space<vmem>>, %arg8: memref<1x32xf32, #tpu.memory_space<vmem>>, %arg9: memref<32x32xf32, #tpu.memory_space<vmem>>, %arg10: memref<1x32xf32, #tpu.memory_space<vmem>>, %arg11: memref<32x52xf32, #tpu.memory_space<vmem>>, %arg12: memref<1x52xf32, #tpu.memory_space<vmem>>, %arg13: memref<32x32xf32, #tpu.memory_space<vmem>>, %arg14: memref<1x32xf32, #tpu.memory_space<vmem>>, %arg15: memref<1x8x32xf32, #tpu.memory_space<vmem>>, %arg16: memref<16x32xf32, #tpu.memory_space<vmem>>, %arg17: memref<16x32xf32, #tpu.memory_space<vmem>>) attributes {dimension_semantics = [#tpu.dimension_semantics<parallel>, #tpu.dimension_semantics<arbitrary>], iteration_bounds = array<i64: 2, 2>, scalar_prefetch = 0 : i64, scratch_operands = 2 : i64, tpu.core_type = #tpu.core_type<tc>, window_params = [{transform_indices = @transform_0, window_bounds = array<i64: 2>}, {transform_indices = @transform_1, window_bounds = array<i64: 2>}, {transform_indices = @transform_2, window_bounds = array<i64: 1, 16, 32>}, {transform_indices = @transform_3, window_bounds = array<i64: 1, 16, 32>}, {transform_indices = @transform_4, window_bounds = array<i64: 1, 8, 32>}, {pipeline_mode = #tpu.pipeline_mode<synchronous>, transform_indices = @transform_5, window_bounds = array<i64: 32, 32>}, {pipeline_mode = #tpu.pipeline_mode<synchronous>, transform_indices = @transform_6, window_bounds = array<i64: 1, 32>}, {pipeline_mode = #tpu.pipeline_mode<synchronous>, transform_indices = @transform_7, window_bounds = array<i64: 32, 32>}, {pipeline_mode = #tpu.pipeline_mode<synchronous>, transform_indices = @transform_8, window_bounds = array<i64: 1, 32>}, {pipeline_mode = #tpu.pipeline_mode<synchronous>, transform_indices = @transform_9, window_bounds = array<i64: 32, 52>}, {pipeline_mode = #tpu.pipeline_mode<synchronous>, transform_indices = @transform_10, window_bounds = array<i64: 1, 52>}, {pipeline_mode = #tpu.pipeline_mode<synchronous>, transform_indices = @transform_11, window_bounds = array<i64: 32, 32>}, {pipeline_mode = #tpu.pipeline_mode<synchronous>, transform_indices = @transform_12, window_bounds = array<i64: 1, 32>}, {transform_indices = @transform_13, window_bounds = array<i64: 1, 8, 32>}]} {
    %c0_i32 = arith.constant 0 : i32
    %0 = arith.cmpi eq, %arg1, %c0_i32 : i32
    %1 = arith.extui %0 : i1 to i32
    %c0_i32_0 = arith.constant 0 : i32
    %2 = arith.cmpi ne, %1, %c0_i32_0 : i32
    scf.if %2 {
      %c0_70 = arith.constant 0 : index
      %c0_71 = arith.constant 0 : index
      %c0_72 = arith.constant 0 : index
      %598 = vector.load %arg4[%c0_70, %c0_71, %c0_72] : memref<1x16x32xf32, #tpu.memory_space<vmem>>, vector<1x16x32xf32>
      %599 = vector.shape_cast %598 : vector<1x16x32xf32> to vector<16x32xf32>
      %c0_73 = arith.constant 0 : index
      %c0_74 = arith.constant 0 : index
      %600 = vector.load %arg7[%c0_73, %c0_74] : memref<32x32xf32, #tpu.memory_space<vmem>>, vector<32x32xf32>
      %cst_75 = arith.constant dense<0.000000e+00> : vector<16x32xf32>
      %601 = tpu.matmul %599, %600, %cst_75 {dimension_numbers = #tpu.dot_dimension_numbers<[1], [0], [0], [1], [0, 0, 1, 1], [], []>} : vector<16x32xf32>, vector<32x32xf32>, vector<16x32xf32> -> vector<16x32xf32>
      %c0_76 = arith.constant 0 : index
      %c0_77 = arith.constant 0 : index
      %602 = vector.load %arg8[%c0_76, %c0_77] : memref<1x32xf32, #tpu.memory_space<vmem>>, vector<1x32xf32>
      %603 = vector.broadcast %602 : vector<1x32xf32> to vector<16x32xf32>
      %604 = arith.addf %601, %603 : vector<16x32xf32>
      %c0_78 = arith.constant 0 : index
      %c0_79 = arith.constant 0 : index
      %c0_80 = arith.constant 0 : index
      %605 = vector.load %arg5[%c0_78, %c0_79, %c0_80] : memref<1x16x32xf32, #tpu.memory_space<vmem>>, vector<1x16x32xf32>
      %606 = vector.shape_cast %605 : vector<1x16x32xf32> to vector<16x32xf32>
      %c0_81 = arith.constant 0 : index
      %c0_82 = arith.constant 0 : index
      %607 = vector.load %arg9[%c0_81, %c0_82] : memref<32x32xf32, #tpu.memory_space<vmem>>, vector<32x32xf32>
      %cst_83 = arith.constant dense<0.000000e+00> : vector<16x32xf32>
      %608 = tpu.matmul %606, %607, %cst_83 {dimension_numbers = #tpu.dot_dimension_numbers<[1], [0], [0], [1], [0, 0, 1, 1], [], []>} : vector<16x32xf32>, vector<32x32xf32>, vector<16x32xf32> -> vector<16x32xf32>
      %c0_84 = arith.constant 0 : index
      %c0_85 = arith.constant 0 : index
      %609 = vector.load %arg10[%c0_84, %c0_85] : memref<1x32xf32, #tpu.memory_space<vmem>>, vector<1x32xf32>
      %610 = vector.broadcast %609 : vector<1x32xf32> to vector<16x32xf32>
      %611 = arith.addf %608, %610 : vector<16x32xf32>
      %c0_86 = arith.constant 0 : index
      %c0_87 = arith.constant 0 : index
      %612 = vector.load %arg16[%c0_86, %c0_87] : memref<16x32xf32, #tpu.memory_space<vmem>>, vector<16x32xf32>
      tpu.vector_store %arg16[%c0_86, %c0_87], %604 {strides = array<i32>} : memref<16x32xf32, #tpu.memory_space<vmem>>, vector<16x32xf32>,
      %c0_88 = arith.constant 0 : index
      %c0_89 = arith.constant 0 : index
      %613 = vector.load %arg17[%c0_88, %c0_89] : memref<16x32xf32, #tpu.memory_space<vmem>>, vector<16x32xf32>
      tpu.vector_store %arg17[%c0_88, %c0_89], %611 {strides = array<i32>} : memref<16x32xf32, #tpu.memory_space<vmem>>, vector<16x32xf32>,
    } else {
    }
    %3 = arith.index_cast %arg0 : i32 to index
    %4 = memref.load %arg2[%3] : memref<2xf32, #tpu.memory_space<smem>>
    %5 = arith.index_cast %arg0 : i32 to index
    %6 = memref.load %arg3[%5] : memref<2xf32, #tpu.memory_space<smem>>
    %c0 = arith.constant 0 : index
    %c0_1 = arith.constant 0 : index
    %c0_2 = arith.constant 0 : index
    %7 = vector.load %arg6[%c0, %c0_1, %c0_2] : memref<1x8x32xf32, #tpu.memory_space<vmem>>, vector<1x8x32xf32>
    %8 = vector.shape_cast %7 : vector<1x8x32xf32> to vector<8x32xf32>
    %c0_3 = arith.constant 0 : index
    %c0_4 = arith.constant 0 : index
    %9 = vector.load %arg11[%c0_3, %c0_4] : memref<32x52xf32, #tpu.memory_space<vmem>>, vector<32x52xf32>
    %cst = arith.constant dense<0.000000e+00> : vector<8x52xf32>
    %10 = tpu.matmul %8, %9, %cst {dimension_numbers = #tpu.dot_dimension_numbers<[1], [0], [0], [1], [0, 0, 1, 1], [], []>} : vector<8x32xf32>, vector<32x52xf32>, vector<8x52xf32> -> vector<8x52xf32>
    %c0_5 = arith.constant 0 : index
    %c0_6 = arith.constant 0 : index
    %11 = vector.load %arg12[%c0_5, %c0_6] : memref<1x52xf32, #tpu.memory_space<vmem>>, vector<1x52xf32>
    %12 = vector.broadcast %11 : vector<1x52xf32> to vector<8x52xf32>
    %13 = arith.addf %10, %12 : vector<8x52xf32>
    %14 = vector.extract_strided_slice %13 {offsets = [0, 0], sizes = [8, 32], strides = [1, 1]} : vector<8x52xf32> to vector<8x32xf32>
    %cst_7 = arith.constant 0.353553385 : f32
    %15 = vector.broadcast %cst_7 : f32 to vector<8x32xf32>
    %16 = arith.mulf %14, %15 : vector<8x32xf32>
    %17 = vector.extract_strided_slice %13 {offsets = [0, 32], sizes = [8, 20], strides = [1, 1]} : vector<8x52xf32> to vector<8x20xf32>
    %18 = tpu.iota {dimensions = array<i32: 0>} : vector<8x1xi32>
    %c8_i32 = arith.constant 8 : i32
    %19 = arith.muli %arg1, %c8_i32 : i32
    %20 = vector.broadcast %19 : i32 to vector<8x1xi32>
    %21 = arith.addi %18, %20 : vector<8x1xi32>
    %22 = arith.sitofp %21 : vector<8x1xi32> to vector<8x1xf32>
    %23 = vector.broadcast %22 : vector<8x1xf32> to vector<8x20xf32>
    %24 = arith.addf %17, %23 : vector<8x20xf32>
    %25 = vector.broadcast %6 : f32 to vector<8x20xf32>
    %26 = arith.mulf %24, %25 : vector<8x20xf32>
    %27 = math.floor %26 : vector<8x20xf32>
    %28 = vector.broadcast %4 : f32 to vector<8x20xf32>
    %29 = arith.mulf %27, %28 : vector<8x20xf32>
    %30 = arith.subf %24, %29 : vector<8x20xf32>
    %cst_8 = arith.constant 1.06666672 : f32
    %31 = vector.broadcast %cst_8 : f32 to vector<8x20xf32>
    %32 = arith.mulf %30, %31 : vector<8x20xf32>
    %cst_9 = arith.constant 5.000000e-01 : f32
    %33 = vector.broadcast %cst_9 : f32 to vector<8x20xf32>
    %34 = arith.subf %32, %33 : vector<8x20xf32>
    %35 = math.floor %34 : vector<8x20xf32>
    %cst_10 = arith.constant 1.000000e+00 : f32
    %36 = vector.broadcast %cst_10 : f32 to vector<8x20xf32>
    %37 = arith.addf %35, %36 : vector<8x20xf32>
    %38 = arith.subf %34, %35 : vector<8x20xf32>
    %cst_11 = arith.constant 5.000000e-01 : f32
    %39 = vector.broadcast %cst_11 : f32 to vector<8x20xf32>
    %40 = arith.mulf %39, %38 : vector<8x20xf32>
    %cst_12 = arith.constant 5.000000e-01 : f32
    %41 = vector.broadcast %cst_12 : f32 to vector<8x20xf32>
    %42 = arith.subf %41, %40 : vector<8x20xf32>
    %43 = tpu.iota {dimensions = array<i32: 1>} : vector<8x16xi32>
    %44 = arith.sitofp %43 : vector<8x16xi32> to vector<8x16xf32>
    %c0_13 = arith.constant 0 : index
    %c0_14 = arith.constant 0 : index
    %45 = vector.load %arg16[%c0_13, %c0_14] : memref<16x32xf32, #tpu.memory_space<vmem>>, vector<16x8xf32>
    %c0_15 = arith.constant 0 : index
    %c0_16 = arith.constant 0 : index
    %46 = vector.load %arg17[%c0_15, %c0_16] : memref<16x32xf32, #tpu.memory_space<vmem>>, vector<16x8xf32>
    %47 = vector.extract_strided_slice %16 {offsets = [0, 0], sizes = [8, 8], strides = [1, 1]} : vector<8x32xf32> to vector<8x8xf32>
    %48 = tpu.transpose %45, [1, 0] : vector<16x8xf32> -> vector<8x16xf32>
    %cst_17 = arith.constant dense<0.000000e+00> : vector<8x16xf32>
    %49 = tpu.matmul %47, %48, %cst_17 {dimension_numbers = #tpu.dot_dimension_numbers<[1], [0], [0], [1], [0, 0, 1, 1], [], []>} : vector<8x8xf32>, vector<8x16xf32>, vector<8x16xf32> -> vector<8x16xf32>
    %50 = vector.extract_strided_slice %42 {offsets = [0, 0], sizes = [8, 1], strides = [1, 1]} : vector<8x20xf32> to vector<8x1xf32>
    %51 = vector.extract_strided_slice %35 {offsets = [0, 0], sizes = [8, 1], strides = [1, 1]} : vector<8x20xf32> to vector<8x1xf32>
    %52 = vector.broadcast %51 : vector<8x1xf32> to vector<8x16xf32>
    %53 = arith.cmpf oeq, %44, %52 : vector<8x16xf32>
    %54 = arith.extui %53 : vector<8x16xi1> to vector<8x16xi32>
    %55 = arith.sitofp %54 : vector<8x16xi32> to vector<8x16xf32>
    %56 = vector.broadcast %50 : vector<8x1xf32> to vector<8x16xf32>
    %57 = arith.mulf %56, %55 : vector<8x16xf32>
    %58 = vector.extract_strided_slice %40 {offsets = [0, 0], sizes = [8, 1], strides = [1, 1]} : vector<8x20xf32> to vector<8x1xf32>
    %59 = vector.extract_strided_slice %37 {offsets = [0, 0], sizes = [8, 1], strides = [1, 1]} : vector<8x20xf32> to vector<8x1xf32>
    %60 = vector.broadcast %59 : vector<8x1xf32> to vector<8x16xf32>
    %61 = arith.cmpf oeq, %44, %60 : vector<8x16xf32>
    %62 = arith.extui %61 : vector<8x16xi1> to vector<8x16xi32>
    %63 = arith.sitofp %62 : vector<8x16xi32> to vector<8x16xf32>
    %64 = vector.broadcast %58 : vector<8x1xf32> to vector<8x16xf32>
    %65 = arith.mulf %64, %63 : vector<8x16xf32>
    %66 = arith.addf %57, %65 : vector<8x16xf32>
    %67 = arith.mulf %66, %49 : vector<8x16xf32>
    %cst_18 = arith.constant dense<0.000000e+00> : vector<8xf32>
    %68 = vector.multi_reduction <add>, %67, %cst_18 [1] : vector<8x16xf32> to vector<8xf32>
    %69 = vector.shape_cast %68 : vector<8xf32> to vector<8x1xf32>
    %70 = vector.extract_strided_slice %42 {offsets = [0, 1], sizes = [8, 1], strides = [1, 1]} : vector<8x20xf32> to vector<8x1xf32>
    %71 = vector.extract_strided_slice %35 {offsets = [0, 1], sizes = [8, 1], strides = [1, 1]} : vector<8x20xf32> to vector<8x1xf32>
    %72 = vector.broadcast %71 : vector<8x1xf32> to vector<8x16xf32>
    %73 = arith.cmpf oeq, %44, %72 : vector<8x16xf32>
    %74 = arith.extui %73 : vector<8x16xi1> to vector<8x16xi32>
    %75 = arith.sitofp %74 : vector<8x16xi32> to vector<8x16xf32>
    %76 = vector.broadcast %70 : vector<8x1xf32> to vector<8x16xf32>
    %77 = arith.mulf %76, %75 : vector<8x16xf32>
    %78 = vector.extract_strided_slice %40 {offsets = [0, 1], sizes = [8, 1], strides = [1, 1]} : vector<8x20xf32> to vector<8x1xf32>
    %79 = vector.extract_strided_slice %37 {offsets = [0, 1], sizes = [8, 1], strides = [1, 1]} : vector<8x20xf32> to vector<8x1xf32>
    %80 = vector.broadcast %79 : vector<8x1xf32> to vector<8x16xf32>
    %81 = arith.cmpf oeq, %44, %80 : vector<8x16xf32>
    %82 = arith.extui %81 : vector<8x16xi1> to vector<8x16xi32>
    %83 = arith.sitofp %82 : vector<8x16xi32> to vector<8x16xf32>
    %84 = vector.broadcast %78 : vector<8x1xf32> to vector<8x16xf32>
    %85 = arith.mulf %84, %83 : vector<8x16xf32>
    %86 = arith.addf %77, %85 : vector<8x16xf32>
    %87 = arith.mulf %86, %49 : vector<8x16xf32>
    %cst_19 = arith.constant dense<0.000000e+00> : vector<8xf32>
    %88 = vector.multi_reduction <add>, %87, %cst_19 [1] : vector<8x16xf32> to vector<8xf32>
    %89 = vector.shape_cast %88 : vector<8xf32> to vector<8x1xf32>
    %90 = vector.extract_strided_slice %42 {offsets = [0, 2], sizes = [8, 1], strides = [1, 1]} : vector<8x20xf32> to vector<8x1xf32>
    %91 = vector.extract_strided_slice %35 {offsets = [0, 2], sizes = [8, 1], strides = [1, 1]} : vector<8x20xf32> to vector<8x1xf32>
    %92 = vector.broadcast %91 : vector<8x1xf32> to vector<8x16xf32>
    %93 = arith.cmpf oeq, %44, %92 : vector<8x16xf32>
    %94 = arith.extui %93 : vector<8x16xi1> to vector<8x16xi32>
    %95 = arith.sitofp %94 : vector<8x16xi32> to vector<8x16xf32>
    %96 = vector.broadcast %90 : vector<8x1xf32> to vector<8x16xf32>
    %97 = arith.mulf %96, %95 : vector<8x16xf32>
    %98 = vector.extract_strided_slice %40 {offsets = [0, 2], sizes = [8, 1], strides = [1, 1]} : vector<8x20xf32> to vector<8x1xf32>
    %99 = vector.extract_strided_slice %37 {offsets = [0, 2], sizes = [8, 1], strides = [1, 1]} : vector<8x20xf32> to vector<8x1xf32>
    %100 = vector.broadcast %99 : vector<8x1xf32> to vector<8x16xf32>
    %101 = arith.cmpf oeq, %44, %100 : vector<8x16xf32>
    %102 = arith.extui %101 : vector<8x16xi1> to vector<8x16xi32>
    %103 = arith.sitofp %102 : vector<8x16xi32> to vector<8x16xf32>
    %104 = vector.broadcast %98 : vector<8x1xf32> to vector<8x16xf32>
    %105 = arith.mulf %104, %103 : vector<8x16xf32>
    %106 = arith.addf %97, %105 : vector<8x16xf32>
    %107 = arith.mulf %106, %49 : vector<8x16xf32>
    %cst_20 = arith.constant dense<0.000000e+00> : vector<8xf32>
    %108 = vector.multi_reduction <add>, %107, %cst_20 [1] : vector<8x16xf32> to vector<8xf32>
    %109 = vector.shape_cast %108 : vector<8xf32> to vector<8x1xf32>
    %110 = vector.extract_strided_slice %42 {offsets = [0, 3], sizes = [8, 1], strides = [1, 1]} : vector<8x20xf32> to vector<8x1xf32>
    %111 = vector.extract_strided_slice %35 {offsets = [0, 3], sizes = [8, 1], strides = [1, 1]} : vector<8x20xf32> to vector<8x1xf32>
    %112 = vector.broadcast %111 : vector<8x1xf32> to vector<8x16xf32>
    %113 = arith.cmpf oeq, %44, %112 : vector<8x16xf32>
    %114 = arith.extui %113 : vector<8x16xi1> to vector<8x16xi32>
    %115 = arith.sitofp %114 : vector<8x16xi32> to vector<8x16xf32>
    %116 = vector.broadcast %110 : vector<8x1xf32> to vector<8x16xf32>
    %117 = arith.mulf %116, %115 : vector<8x16xf32>
    %118 = vector.extract_strided_slice %40 {offsets = [0, 3], sizes = [8, 1], strides = [1, 1]} : vector<8x20xf32> to vector<8x1xf32>
    %119 = vector.extract_strided_slice %37 {offsets = [0, 3], sizes = [8, 1], strides = [1, 1]} : vector<8x20xf32> to vector<8x1xf32>
    %120 = vector.broadcast %119 : vector<8x1xf32> to vector<8x16xf32>
    %121 = arith.cmpf oeq, %44, %120 : vector<8x16xf32>
    %122 = arith.extui %121 : vector<8x16xi1> to vector<8x16xi32>
    %123 = arith.sitofp %122 : vector<8x16xi32> to vector<8x16xf32>
    %124 = vector.broadcast %118 : vector<8x1xf32> to vector<8x16xf32>
    %125 = arith.mulf %124, %123 : vector<8x16xf32>
    %126 = arith.addf %117, %125 : vector<8x16xf32>
    %127 = arith.mulf %126, %49 : vector<8x16xf32>
    %cst_21 = arith.constant dense<0.000000e+00> : vector<8xf32>
    %128 = vector.multi_reduction <add>, %127, %cst_21 [1] : vector<8x16xf32> to vector<8xf32>
    %129 = vector.shape_cast %128 : vector<8xf32> to vector<8x1xf32>
    %130 = vector.extract_strided_slice %42 {offsets = [0, 4], sizes = [8, 1], strides = [1, 1]} : vector<8x20xf32> to vector<8x1xf32>
    %131 = vector.extract_strided_slice %35 {offsets = [0, 4], sizes = [8, 1], strides = [1, 1]} : vector<8x20xf32> to vector<8x1xf32>
    %132 = vector.broadcast %131 : vector<8x1xf32> to vector<8x16xf32>
    %133 = arith.cmpf oeq, %44, %132 : vector<8x16xf32>
    %134 = arith.extui %133 : vector<8x16xi1> to vector<8x16xi32>
    %135 = arith.sitofp %134 : vector<8x16xi32> to vector<8x16xf32>
    %136 = vector.broadcast %130 : vector<8x1xf32> to vector<8x16xf32>
    %137 = arith.mulf %136, %135 : vector<8x16xf32>
    %138 = vector.extract_strided_slice %40 {offsets = [0, 4], sizes = [8, 1], strides = [1, 1]} : vector<8x20xf32> to vector<8x1xf32>
    %139 = vector.extract_strided_slice %37 {offsets = [0, 4], sizes = [8, 1], strides = [1, 1]} : vector<8x20xf32> to vector<8x1xf32>
    %140 = vector.broadcast %139 : vector<8x1xf32> to vector<8x16xf32>
    %141 = arith.cmpf oeq, %44, %140 : vector<8x16xf32>
    %142 = arith.extui %141 : vector<8x16xi1> to vector<8x16xi32>
    %143 = arith.sitofp %142 : vector<8x16xi32> to vector<8x16xf32>
    %144 = vector.broadcast %138 : vector<8x1xf32> to vector<8x16xf32>
    %145 = arith.mulf %144, %143 : vector<8x16xf32>
    %146 = arith.addf %137, %145 : vector<8x16xf32>
    %147 = arith.mulf %146, %49 : vector<8x16xf32>
    %cst_22 = arith.constant dense<0.000000e+00> : vector<8xf32>
    %148 = vector.multi_reduction <add>, %147, %cst_22 [1] : vector<8x16xf32> to vector<8xf32>
    %149 = vector.shape_cast %148 : vector<8xf32> to vector<8x1xf32>
    %150 = tpu.concatenate %69, %89, %109, %129, %149 in 1 : vector<8x1xf32>, vector<8x1xf32>, vector<8x1xf32>, vector<8x1xf32>, vector<8x1xf32> -> vector<8x5xf32>
    %cst_23 = arith.constant dense<0xFF800000> : vector<8xf32>
    %151 = vector.multi_reduction <maximumf>, %150, %cst_23 [1] : vector<8x5xf32> to vector<8xf32>
    %152 = vector.shape_cast %151 : vector<8xf32> to vector<8x1xf32>
    %153 = vector.broadcast %152 : vector<8x1xf32> to vector<8x5xf32>
    %154 = arith.subf %150, %153 : vector<8x5xf32>
    %155 = math.exp %154 : vector<8x5xf32>
    %cst_24 = arith.constant dense<0.000000e+00> : vector<8xf32>
    %156 = vector.multi_reduction <add>, %155, %cst_24 [1] : vector<8x5xf32> to vector<8xf32>
    %157 = vector.shape_cast %156 : vector<8xf32> to vector<8x1xf32>
    %158 = tpu.reciprocal %157 {approx = true} : vector<8x1xf32> -> vector<8x1xf32>
    %159 = vector.broadcast %158 : vector<8x1xf32> to vector<8x5xf32>
    %160 = arith.mulf %155, %159 : vector<8x5xf32>
    %161 = vector.extract_strided_slice %160 {offsets = [0, 0], sizes = [8, 1], strides = [1, 1]} : vector<8x5xf32> to vector<8x1xf32>
    %162 = vector.broadcast %161 : vector<8x1xf32> to vector<8x16xf32>
    %163 = arith.mulf %162, %66 : vector<8x16xf32>
    %164 = vector.extract_strided_slice %160 {offsets = [0, 1], sizes = [8, 1], strides = [1, 1]} : vector<8x5xf32> to vector<8x1xf32>
    %165 = vector.broadcast %164 : vector<8x1xf32> to vector<8x16xf32>
    %166 = arith.mulf %165, %86 : vector<8x16xf32>
    %167 = arith.addf %163, %166 : vector<8x16xf32>
    %168 = vector.extract_strided_slice %160 {offsets = [0, 2], sizes = [8, 1], strides = [1, 1]} : vector<8x5xf32> to vector<8x1xf32>
    %169 = vector.broadcast %168 : vector<8x1xf32> to vector<8x16xf32>
    %170 = arith.mulf %169, %106 : vector<8x16xf32>
    %171 = arith.addf %167, %170 : vector<8x16xf32>
    %172 = vector.extract_strided_slice %160 {offsets = [0, 3], sizes = [8, 1], strides = [1, 1]} : vector<8x5xf32> to vector<8x1xf32>
    %173 = vector.broadcast %172 : vector<8x1xf32> to vector<8x16xf32>
    %174 = arith.mulf %173, %126 : vector<8x16xf32>
    %175 = arith.addf %171, %174 : vector<8x16xf32>
    %176 = vector.extract_strided_slice %160 {offsets = [0, 4], sizes = [8, 1], strides = [1, 1]} : vector<8x5xf32> to vector<8x1xf32>
    %177 = vector.broadcast %176 : vector<8x1xf32> to vector<8x16xf32>
    %178 = arith.mulf %177, %146 : vector<8x16xf32>
    %179 = arith.addf %175, %178 : vector<8x16xf32>
    %cst_25 = arith.constant dense<0.000000e+00> : vector<8x8xf32>
    %180 = tpu.matmul %179, %46, %cst_25 {dimension_numbers = #tpu.dot_dimension_numbers<[1], [0], [0], [1], [0, 0, 1, 1], [], []>} : vector<8x16xf32>, vector<16x8xf32>, vector<8x8xf32> -> vector<8x8xf32>
    %c0_26 = arith.constant 0 : index
    %c8 = arith.constant 8 : index
    %181 = vector.load %arg16[%c0_26, %c8] : memref<16x32xf32, #tpu.memory_space<vmem>>, vector<16x8xf32>
    %c0_27 = arith.constant 0 : index
    %c8_28 = arith.constant 8 : index
    %182 = vector.load %arg17[%c0_27, %c8_28] : memref<16x32xf32, #tpu.memory_space<vmem>>, vector<16x8xf32>
    %183 = vector.extract_strided_slice %16 {offsets = [0, 8], sizes = [8, 8], strides = [1, 1]} : vector<8x32xf32> to vector<8x8xf32>
    %184 = tpu.transpose %181, [1, 0] : vector<16x8xf32> -> vector<8x16xf32>
    %cst_29 = arith.constant dense<0.000000e+00> : vector<8x16xf32>
    %185 = tpu.matmul %183, %184, %cst_29 {dimension_numbers = #tpu.dot_dimension_numbers<[1], [0], [0], [1], [0, 0, 1, 1], [], []>} : vector<8x8xf32>, vector<8x16xf32>, vector<8x16xf32> -> vector<8x16xf32>
    %186 = vector.extract_strided_slice %42 {offsets = [0, 5], sizes = [8, 1], strides = [1, 1]} : vector<8x20xf32> to vector<8x1xf32>
    %187 = vector.extract_strided_slice %35 {offsets = [0, 5], sizes = [8, 1], strides = [1, 1]} : vector<8x20xf32> to vector<8x1xf32>
    %188 = vector.broadcast %187 : vector<8x1xf32> to vector<8x16xf32>
    %189 = arith.cmpf oeq, %44, %188 : vector<8x16xf32>
    %190 = arith.extui %189 : vector<8x16xi1> to vector<8x16xi32>
    %191 = arith.sitofp %190 : vector<8x16xi32> to vector<8x16xf32>
    %192 = vector.broadcast %186 : vector<8x1xf32> to vector<8x16xf32>
    %193 = arith.mulf %192, %191 : vector<8x16xf32>
    %194 = vector.extract_strided_slice %40 {offsets = [0, 5], sizes = [8, 1], strides = [1, 1]} : vector<8x20xf32> to vector<8x1xf32>
    %195 = vector.extract_strided_slice %37 {offsets = [0, 5], sizes = [8, 1], strides = [1, 1]} : vector<8x20xf32> to vector<8x1xf32>
    %196 = vector.broadcast %195 : vector<8x1xf32> to vector<8x16xf32>
    %197 = arith.cmpf oeq, %44, %196 : vector<8x16xf32>
    %198 = arith.extui %197 : vector<8x16xi1> to vector<8x16xi32>
    %199 = arith.sitofp %198 : vector<8x16xi32> to vector<8x16xf32>
    %200 = vector.broadcast %194 : vector<8x1xf32> to vector<8x16xf32>
    %201 = arith.mulf %200, %199 : vector<8x16xf32>
    %202 = arith.addf %193, %201 : vector<8x16xf32>
    %203 = arith.mulf %202, %185 : vector<8x16xf32>
    %cst_30 = arith.constant dense<0.000000e+00> : vector<8xf32>
    %204 = vector.multi_reduction <add>, %203, %cst_30 [1] : vector<8x16xf32> to vector<8xf32>
    %205 = vector.shape_cast %204 : vector<8xf32> to vector<8x1xf32>
    %206 = vector.extract_strided_slice %42 {offsets = [0, 6], sizes = [8, 1], strides = [1, 1]} : vector<8x20xf32> to vector<8x1xf32>
    %207 = vector.extract_strided_slice %35 {offsets = [0, 6], sizes = [8, 1], strides = [1, 1]} : vector<8x20xf32> to vector<8x1xf32>
    %208 = vector.broadcast %207 : vector<8x1xf32> to vector<8x16xf32>
    %209 = arith.cmpf oeq, %44, %208 : vector<8x16xf32>
    %210 = arith.extui %209 : vector<8x16xi1> to vector<8x16xi32>
    %211 = arith.sitofp %210 : vector<8x16xi32> to vector<8x16xf32>
    %212 = vector.broadcast %206 : vector<8x1xf32> to vector<8x16xf32>
    %213 = arith.mulf %212, %211 : vector<8x16xf32>
    %214 = vector.extract_strided_slice %40 {offsets = [0, 6], sizes = [8, 1], strides = [1, 1]} : vector<8x20xf32> to vector<8x1xf32>
    %215 = vector.extract_strided_slice %37 {offsets = [0, 6], sizes = [8, 1], strides = [1, 1]} : vector<8x20xf32> to vector<8x1xf32>
    %216 = vector.broadcast %215 : vector<8x1xf32> to vector<8x16xf32>
    %217 = arith.cmpf oeq, %44, %216 : vector<8x16xf32>
    %218 = arith.extui %217 : vector<8x16xi1> to vector<8x16xi32>
    %219 = arith.sitofp %218 : vector<8x16xi32> to vector<8x16xf32>
    %220 = vector.broadcast %214 : vector<8x1xf32> to vector<8x16xf32>
    %221 = arith.mulf %220, %219 : vector<8x16xf32>
    %222 = arith.addf %213, %221 : vector<8x16xf32>
    %223 = arith.mulf %222, %185 : vector<8x16xf32>
    %cst_31 = arith.constant dense<0.000000e+00> : vector<8xf32>
    %224 = vector.multi_reduction <add>, %223, %cst_31 [1] : vector<8x16xf32> to vector<8xf32>
    %225 = vector.shape_cast %224 : vector<8xf32> to vector<8x1xf32>
    %226 = vector.extract_strided_slice %42 {offsets = [0, 7], sizes = [8, 1], strides = [1, 1]} : vector<8x20xf32> to vector<8x1xf32>
    %227 = vector.extract_strided_slice %35 {offsets = [0, 7], sizes = [8, 1], strides = [1, 1]} : vector<8x20xf32> to vector<8x1xf32>
    %228 = vector.broadcast %227 : vector<8x1xf32> to vector<8x16xf32>
    %229 = arith.cmpf oeq, %44, %228 : vector<8x16xf32>
    %230 = arith.extui %229 : vector<8x16xi1> to vector<8x16xi32>
    %231 = arith.sitofp %230 : vector<8x16xi32> to vector<8x16xf32>
    %232 = vector.broadcast %226 : vector<8x1xf32> to vector<8x16xf32>
    %233 = arith.mulf %232, %231 : vector<8x16xf32>
    %234 = vector.extract_strided_slice %40 {offsets = [0, 7], sizes = [8, 1], strides = [1, 1]} : vector<8x20xf32> to vector<8x1xf32>
    %235 = vector.extract_strided_slice %37 {offsets = [0, 7], sizes = [8, 1], strides = [1, 1]} : vector<8x20xf32> to vector<8x1xf32>
    %236 = vector.broadcast %235 : vector<8x1xf32> to vector<8x16xf32>
    %237 = arith.cmpf oeq, %44, %236 : vector<8x16xf32>
    %238 = arith.extui %237 : vector<8x16xi1> to vector<8x16xi32>
    %239 = arith.sitofp %238 : vector<8x16xi32> to vector<8x16xf32>
    %240 = vector.broadcast %234 : vector<8x1xf32> to vector<8x16xf32>
    %241 = arith.mulf %240, %239 : vector<8x16xf32>
    %242 = arith.addf %233, %241 : vector<8x16xf32>
    %243 = arith.mulf %242, %185 : vector<8x16xf32>
    %cst_32 = arith.constant dense<0.000000e+00> : vector<8xf32>
    %244 = vector.multi_reduction <add>, %243, %cst_32 [1] : vector<8x16xf32> to vector<8xf32>
    %245 = vector.shape_cast %244 : vector<8xf32> to vector<8x1xf32>
    %246 = vector.extract_strided_slice %42 {offsets = [0, 8], sizes = [8, 1], strides = [1, 1]} : vector<8x20xf32> to vector<8x1xf32>
    %247 = vector.extract_strided_slice %35 {offsets = [0, 8], sizes = [8, 1], strides = [1, 1]} : vector<8x20xf32> to vector<8x1xf32>
    %248 = vector.broadcast %247 : vector<8x1xf32> to vector<8x16xf32>
    %249 = arith.cmpf oeq, %44, %248 : vector<8x16xf32>
    %250 = arith.extui %249 : vector<8x16xi1> to vector<8x16xi32>
    %251 = arith.sitofp %250 : vector<8x16xi32> to vector<8x16xf32>
    %252 = vector.broadcast %246 : vector<8x1xf32> to vector<8x16xf32>
    %253 = arith.mulf %252, %251 : vector<8x16xf32>
    %254 = vector.extract_strided_slice %40 {offsets = [0, 8], sizes = [8, 1], strides = [1, 1]} : vector<8x20xf32> to vector<8x1xf32>
    %255 = vector.extract_strided_slice %37 {offsets = [0, 8], sizes = [8, 1], strides = [1, 1]} : vector<8x20xf32> to vector<8x1xf32>
    %256 = vector.broadcast %255 : vector<8x1xf32> to vector<8x16xf32>
    %257 = arith.cmpf oeq, %44, %256 : vector<8x16xf32>
    %258 = arith.extui %257 : vector<8x16xi1> to vector<8x16xi32>
    %259 = arith.sitofp %258 : vector<8x16xi32> to vector<8x16xf32>
    %260 = vector.broadcast %254 : vector<8x1xf32> to vector<8x16xf32>
    %261 = arith.mulf %260, %259 : vector<8x16xf32>
    %262 = arith.addf %253, %261 : vector<8x16xf32>
    %263 = arith.mulf %262, %185 : vector<8x16xf32>
    %cst_33 = arith.constant dense<0.000000e+00> : vector<8xf32>
    %264 = vector.multi_reduction <add>, %263, %cst_33 [1] : vector<8x16xf32> to vector<8xf32>
    %265 = vector.shape_cast %264 : vector<8xf32> to vector<8x1xf32>
    %266 = vector.extract_strided_slice %42 {offsets = [0, 9], sizes = [8, 1], strides = [1, 1]} : vector<8x20xf32> to vector<8x1xf32>
    %267 = vector.extract_strided_slice %35 {offsets = [0, 9], sizes = [8, 1], strides = [1, 1]} : vector<8x20xf32> to vector<8x1xf32>
    %268 = vector.broadcast %267 : vector<8x1xf32> to vector<8x16xf32>
    %269 = arith.cmpf oeq, %44, %268 : vector<8x16xf32>
    %270 = arith.extui %269 : vector<8x16xi1> to vector<8x16xi32>
    %271 = arith.sitofp %270 : vector<8x16xi32> to vector<8x16xf32>
    %272 = vector.broadcast %266 : vector<8x1xf32> to vector<8x16xf32>
    %273 = arith.mulf %272, %271 : vector<8x16xf32>
    %274 = vector.extract_strided_slice %40 {offsets = [0, 9], sizes = [8, 1], strides = [1, 1]} : vector<8x20xf32> to vector<8x1xf32>
    %275 = vector.extract_strided_slice %37 {offsets = [0, 9], sizes = [8, 1], strides = [1, 1]} : vector<8x20xf32> to vector<8x1xf32>
    %276 = vector.broadcast %275 : vector<8x1xf32> to vector<8x16xf32>
    %277 = arith.cmpf oeq, %44, %276 : vector<8x16xf32>
    %278 = arith.extui %277 : vector<8x16xi1> to vector<8x16xi32>
    %279 = arith.sitofp %278 : vector<8x16xi32> to vector<8x16xf32>
    %280 = vector.broadcast %274 : vector<8x1xf32> to vector<8x16xf32>
    %281 = arith.mulf %280, %279 : vector<8x16xf32>
    %282 = arith.addf %273, %281 : vector<8x16xf32>
    %283 = arith.mulf %282, %185 : vector<8x16xf32>
    %cst_34 = arith.constant dense<0.000000e+00> : vector<8xf32>
    %284 = vector.multi_reduction <add>, %283, %cst_34 [1] : vector<8x16xf32> to vector<8xf32>
    %285 = vector.shape_cast %284 : vector<8xf32> to vector<8x1xf32>
    %286 = tpu.concatenate %205, %225, %245, %265, %285 in 1 : vector<8x1xf32>, vector<8x1xf32>, vector<8x1xf32>, vector<8x1xf32>, vector<8x1xf32> -> vector<8x5xf32>
    %cst_35 = arith.constant dense<0xFF800000> : vector<8xf32>
    %287 = vector.multi_reduction <maximumf>, %286, %cst_35 [1] : vector<8x5xf32> to vector<8xf32>
    %288 = vector.shape_cast %287 : vector<8xf32> to vector<8x1xf32>
    %289 = vector.broadcast %288 : vector<8x1xf32> to vector<8x5xf32>
    %290 = arith.subf %286, %289 : vector<8x5xf32>
    %291 = math.exp %290 : vector<8x5xf32>
    %cst_36 = arith.constant dense<0.000000e+00> : vector<8xf32>
    %292 = vector.multi_reduction <add>, %291, %cst_36 [1] : vector<8x5xf32> to vector<8xf32>
    %293 = vector.shape_cast %292 : vector<8xf32> to vector<8x1xf32>
    %294 = tpu.reciprocal %293 {approx = true} : vector<8x1xf32> -> vector<8x1xf32>
    %295 = vector.broadcast %294 : vector<8x1xf32> to vector<8x5xf32>
    %296 = arith.mulf %291, %295 : vector<8x5xf32>
    %297 = vector.extract_strided_slice %296 {offsets = [0, 0], sizes = [8, 1], strides = [1, 1]} : vector<8x5xf32> to vector<8x1xf32>
    %298 = vector.broadcast %297 : vector<8x1xf32> to vector<8x16xf32>
    %299 = arith.mulf %298, %202 : vector<8x16xf32>
    %300 = vector.extract_strided_slice %296 {offsets = [0, 1], sizes = [8, 1], strides = [1, 1]} : vector<8x5xf32> to vector<8x1xf32>
    %301 = vector.broadcast %300 : vector<8x1xf32> to vector<8x16xf32>
    %302 = arith.mulf %301, %222 : vector<8x16xf32>
    %303 = arith.addf %299, %302 : vector<8x16xf32>
    %304 = vector.extract_strided_slice %296 {offsets = [0, 2], sizes = [8, 1], strides = [1, 1]} : vector<8x5xf32> to vector<8x1xf32>
    %305 = vector.broadcast %304 : vector<8x1xf32> to vector<8x16xf32>
    %306 = arith.mulf %305, %242 : vector<8x16xf32>
    %307 = arith.addf %303, %306 : vector<8x16xf32>
    %308 = vector.extract_strided_slice %296 {offsets = [0, 3], sizes = [8, 1], strides = [1, 1]} : vector<8x5xf32> to vector<8x1xf32>
    %309 = vector.broadcast %308 : vector<8x1xf32> to vector<8x16xf32>
    %310 = arith.mulf %309, %262 : vector<8x16xf32>
    %311 = arith.addf %307, %310 : vector<8x16xf32>
    %312 = vector.extract_strided_slice %296 {offsets = [0, 4], sizes = [8, 1], strides = [1, 1]} : vector<8x5xf32> to vector<8x1xf32>
    %313 = vector.broadcast %312 : vector<8x1xf32> to vector<8x16xf32>
    %314 = arith.mulf %313, %282 : vector<8x16xf32>
    %315 = arith.addf %311, %314 : vector<8x16xf32>
    %cst_37 = arith.constant dense<0.000000e+00> : vector<8x8xf32>
    %316 = tpu.matmul %315, %182, %cst_37 {dimension_numbers = #tpu.dot_dimension_numbers<[1], [0], [0], [1], [0, 0, 1, 1], [], []>} : vector<8x16xf32>, vector<16x8xf32>, vector<8x8xf32> -> vector<8x8xf32>
    %c0_38 = arith.constant 0 : index
    %c16 = arith.constant 16 : index
    %317 = vector.load %arg16[%c0_38, %c16] : memref<16x32xf32, #tpu.memory_space<vmem>>, vector<16x8xf32>
    %c0_39 = arith.constant 0 : index
    %c16_40 = arith.constant 16 : index
    %318 = vector.load %arg17[%c0_39, %c16_40] : memref<16x32xf32, #tpu.memory_space<vmem>>, vector<16x8xf32>
    %319 = vector.extract_strided_slice %16 {offsets = [0, 16], sizes = [8, 8], strides = [1, 1]} : vector<8x32xf32> to vector<8x8xf32>
    %320 = tpu.transpose %317, [1, 0] : vector<16x8xf32> -> vector<8x16xf32>
    %cst_41 = arith.constant dense<0.000000e+00> : vector<8x16xf32>
    %321 = tpu.matmul %319, %320, %cst_41 {dimension_numbers = #tpu.dot_dimension_numbers<[1], [0], [0], [1], [0, 0, 1, 1], [], []>} : vector<8x8xf32>, vector<8x16xf32>, vector<8x16xf32> -> vector<8x16xf32>
    %322 = vector.extract_strided_slice %42 {offsets = [0, 10], sizes = [8, 1], strides = [1, 1]} : vector<8x20xf32> to vector<8x1xf32>
    %323 = vector.extract_strided_slice %35 {offsets = [0, 10], sizes = [8, 1], strides = [1, 1]} : vector<8x20xf32> to vector<8x1xf32>
    %324 = vector.broadcast %323 : vector<8x1xf32> to vector<8x16xf32>
    %325 = arith.cmpf oeq, %44, %324 : vector<8x16xf32>
    %326 = arith.extui %325 : vector<8x16xi1> to vector<8x16xi32>
    %327 = arith.sitofp %326 : vector<8x16xi32> to vector<8x16xf32>
    %328 = vector.broadcast %322 : vector<8x1xf32> to vector<8x16xf32>
    %329 = arith.mulf %328, %327 : vector<8x16xf32>
    %330 = vector.extract_strided_slice %40 {offsets = [0, 10], sizes = [8, 1], strides = [1, 1]} : vector<8x20xf32> to vector<8x1xf32>
    %331 = vector.extract_strided_slice %37 {offsets = [0, 10], sizes = [8, 1], strides = [1, 1]} : vector<8x20xf32> to vector<8x1xf32>
    %332 = vector.broadcast %331 : vector<8x1xf32> to vector<8x16xf32>
    %333 = arith.cmpf oeq, %44, %332 : vector<8x16xf32>
    %334 = arith.extui %333 : vector<8x16xi1> to vector<8x16xi32>
    %335 = arith.sitofp %334 : vector<8x16xi32> to vector<8x16xf32>
    %336 = vector.broadcast %330 : vector<8x1xf32> to vector<8x16xf32>
    %337 = arith.mulf %336, %335 : vector<8x16xf32>
    %338 = arith.addf %329, %337 : vector<8x16xf32>
    %339 = arith.mulf %338, %321 : vector<8x16xf32>
    %cst_42 = arith.constant dense<0.000000e+00> : vector<8xf32>
    %340 = vector.multi_reduction <add>, %339, %cst_42 [1] : vector<8x16xf32> to vector<8xf32>
    %341 = vector.shape_cast %340 : vector<8xf32> to vector<8x1xf32>
    %342 = vector.extract_strided_slice %42 {offsets = [0, 11], sizes = [8, 1], strides = [1, 1]} : vector<8x20xf32> to vector<8x1xf32>
    %343 = vector.extract_strided_slice %35 {offsets = [0, 11], sizes = [8, 1], strides = [1, 1]} : vector<8x20xf32> to vector<8x1xf32>
    %344 = vector.broadcast %343 : vector<8x1xf32> to vector<8x16xf32>
    %345 = arith.cmpf oeq, %44, %344 : vector<8x16xf32>
    %346 = arith.extui %345 : vector<8x16xi1> to vector<8x16xi32>
    %347 = arith.sitofp %346 : vector<8x16xi32> to vector<8x16xf32>
    %348 = vector.broadcast %342 : vector<8x1xf32> to vector<8x16xf32>
    %349 = arith.mulf %348, %347 : vector<8x16xf32>
    %350 = vector.extract_strided_slice %40 {offsets = [0, 11], sizes = [8, 1], strides = [1, 1]} : vector<8x20xf32> to vector<8x1xf32>
    %351 = vector.extract_strided_slice %37 {offsets = [0, 11], sizes = [8, 1], strides = [1, 1]} : vector<8x20xf32> to vector<8x1xf32>
    %352 = vector.broadcast %351 : vector<8x1xf32> to vector<8x16xf32>
    %353 = arith.cmpf oeq, %44, %352 : vector<8x16xf32>
    %354 = arith.extui %353 : vector<8x16xi1> to vector<8x16xi32>
    %355 = arith.sitofp %354 : vector<8x16xi32> to vector<8x16xf32>
    %356 = vector.broadcast %350 : vector<8x1xf32> to vector<8x16xf32>
    %357 = arith.mulf %356, %355 : vector<8x16xf32>
    %358 = arith.addf %349, %357 : vector<8x16xf32>
    %359 = arith.mulf %358, %321 : vector<8x16xf32>
    %cst_43 = arith.constant dense<0.000000e+00> : vector<8xf32>
    %360 = vector.multi_reduction <add>, %359, %cst_43 [1] : vector<8x16xf32> to vector<8xf32>
    %361 = vector.shape_cast %360 : vector<8xf32> to vector<8x1xf32>
    %362 = vector.extract_strided_slice %42 {offsets = [0, 12], sizes = [8, 1], strides = [1, 1]} : vector<8x20xf32> to vector<8x1xf32>
    %363 = vector.extract_strided_slice %35 {offsets = [0, 12], sizes = [8, 1], strides = [1, 1]} : vector<8x20xf32> to vector<8x1xf32>
    %364 = vector.broadcast %363 : vector<8x1xf32> to vector<8x16xf32>
    %365 = arith.cmpf oeq, %44, %364 : vector<8x16xf32>
    %366 = arith.extui %365 : vector<8x16xi1> to vector<8x16xi32>
    %367 = arith.sitofp %366 : vector<8x16xi32> to vector<8x16xf32>
    %368 = vector.broadcast %362 : vector<8x1xf32> to vector<8x16xf32>
    %369 = arith.mulf %368, %367 : vector<8x16xf32>
    %370 = vector.extract_strided_slice %40 {offsets = [0, 12], sizes = [8, 1], strides = [1, 1]} : vector<8x20xf32> to vector<8x1xf32>
    %371 = vector.extract_strided_slice %37 {offsets = [0, 12], sizes = [8, 1], strides = [1, 1]} : vector<8x20xf32> to vector<8x1xf32>
    %372 = vector.broadcast %371 : vector<8x1xf32> to vector<8x16xf32>
    %373 = arith.cmpf oeq, %44, %372 : vector<8x16xf32>
    %374 = arith.extui %373 : vector<8x16xi1> to vector<8x16xi32>
    %375 = arith.sitofp %374 : vector<8x16xi32> to vector<8x16xf32>
    %376 = vector.broadcast %370 : vector<8x1xf32> to vector<8x16xf32>
    %377 = arith.mulf %376, %375 : vector<8x16xf32>
    %378 = arith.addf %369, %377 : vector<8x16xf32>
    %379 = arith.mulf %378, %321 : vector<8x16xf32>
    %cst_44 = arith.constant dense<0.000000e+00> : vector<8xf32>
    %380 = vector.multi_reduction <add>, %379, %cst_44 [1] : vector<8x16xf32> to vector<8xf32>
    %381 = vector.shape_cast %380 : vector<8xf32> to vector<8x1xf32>
    %382 = vector.extract_strided_slice %42 {offsets = [0, 13], sizes = [8, 1], strides = [1, 1]} : vector<8x20xf32> to vector<8x1xf32>
    %383 = vector.extract_strided_slice %35 {offsets = [0, 13], sizes = [8, 1], strides = [1, 1]} : vector<8x20xf32> to vector<8x1xf32>
    %384 = vector.broadcast %383 : vector<8x1xf32> to vector<8x16xf32>
    %385 = arith.cmpf oeq, %44, %384 : vector<8x16xf32>
    %386 = arith.extui %385 : vector<8x16xi1> to vector<8x16xi32>
    %387 = arith.sitofp %386 : vector<8x16xi32> to vector<8x16xf32>
    %388 = vector.broadcast %382 : vector<8x1xf32> to vector<8x16xf32>
    %389 = arith.mulf %388, %387 : vector<8x16xf32>
    %390 = vector.extract_strided_slice %40 {offsets = [0, 13], sizes = [8, 1], strides = [1, 1]} : vector<8x20xf32> to vector<8x1xf32>
    %391 = vector.extract_strided_slice %37 {offsets = [0, 13], sizes = [8, 1], strides = [1, 1]} : vector<8x20xf32> to vector<8x1xf32>
    %392 = vector.broadcast %391 : vector<8x1xf32> to vector<8x16xf32>
    %393 = arith.cmpf oeq, %44, %392 : vector<8x16xf32>
    %394 = arith.extui %393 : vector<8x16xi1> to vector<8x16xi32>
    %395 = arith.sitofp %394 : vector<8x16xi32> to vector<8x16xf32>
    %396 = vector.broadcast %390 : vector<8x1xf32> to vector<8x16xf32>
    %397 = arith.mulf %396, %395 : vector<8x16xf32>
    %398 = arith.addf %389, %397 : vector<8x16xf32>
    %399 = arith.mulf %398, %321 : vector<8x16xf32>
    %cst_45 = arith.constant dense<0.000000e+00> : vector<8xf32>
    %400 = vector.multi_reduction <add>, %399, %cst_45 [1] : vector<8x16xf32> to vector<8xf32>
    %401 = vector.shape_cast %400 : vector<8xf32> to vector<8x1xf32>
    %402 = vector.extract_strided_slice %42 {offsets = [0, 14], sizes = [8, 1], strides = [1, 1]} : vector<8x20xf32> to vector<8x1xf32>
    %403 = vector.extract_strided_slice %35 {offsets = [0, 14], sizes = [8, 1], strides = [1, 1]} : vector<8x20xf32> to vector<8x1xf32>
    %404 = vector.broadcast %403 : vector<8x1xf32> to vector<8x16xf32>
    %405 = arith.cmpf oeq, %44, %404 : vector<8x16xf32>
    %406 = arith.extui %405 : vector<8x16xi1> to vector<8x16xi32>
    %407 = arith.sitofp %406 : vector<8x16xi32> to vector<8x16xf32>
    %408 = vector.broadcast %402 : vector<8x1xf32> to vector<8x16xf32>
    %409 = arith.mulf %408, %407 : vector<8x16xf32>
    %410 = vector.extract_strided_slice %40 {offsets = [0, 14], sizes = [8, 1], strides = [1, 1]} : vector<8x20xf32> to vector<8x1xf32>
    %411 = vector.extract_strided_slice %37 {offsets = [0, 14], sizes = [8, 1], strides = [1, 1]} : vector<8x20xf32> to vector<8x1xf32>
    %412 = vector.broadcast %411 : vector<8x1xf32> to vector<8x16xf32>
    %413 = arith.cmpf oeq, %44, %412 : vector<8x16xf32>
    %414 = arith.extui %413 : vector<8x16xi1> to vector<8x16xi32>
    %415 = arith.sitofp %414 : vector<8x16xi32> to vector<8x16xf32>
    %416 = vector.broadcast %410 : vector<8x1xf32> to vector<8x16xf32>
    %417 = arith.mulf %416, %415 : vector<8x16xf32>
    %418 = arith.addf %409, %417 : vector<8x16xf32>
    %419 = arith.mulf %418, %321 : vector<8x16xf32>
    %cst_46 = arith.constant dense<0.000000e+00> : vector<8xf32>
    %420 = vector.multi_reduction <add>, %419, %cst_46 [1] : vector<8x16xf32> to vector<8xf32>
    %421 = vector.shape_cast %420 : vector<8xf32> to vector<8x1xf32>
    %422 = tpu.concatenate %341, %361, %381, %401, %421 in 1 : vector<8x1xf32>, vector<8x1xf32>, vector<8x1xf32>, vector<8x1xf32>, vector<8x1xf32> -> vector<8x5xf32>
    %cst_47 = arith.constant dense<0xFF800000> : vector<8xf32>
    %423 = vector.multi_reduction <maximumf>, %422, %cst_47 [1] : vector<8x5xf32> to vector<8xf32>
    %424 = vector.shape_cast %423 : vector<8xf32> to vector<8x1xf32>
    %425 = vector.broadcast %424 : vector<8x1xf32> to vector<8x5xf32>
    %426 = arith.subf %422, %425 : vector<8x5xf32>
    %427 = math.exp %426 : vector<8x5xf32>
    %cst_48 = arith.constant dense<0.000000e+00> : vector<8xf32>
    %428 = vector.multi_reduction <add>, %427, %cst_48 [1] : vector<8x5xf32> to vector<8xf32>
    %429 = vector.shape_cast %428 : vector<8xf32> to vector<8x1xf32>
    %430 = tpu.reciprocal %429 {approx = true} : vector<8x1xf32> -> vector<8x1xf32>
    %431 = vector.broadcast %430 : vector<8x1xf32> to vector<8x5xf32>
    %432 = arith.mulf %427, %431 : vector<8x5xf32>
    %433 = vector.extract_strided_slice %432 {offsets = [0, 0], sizes = [8, 1], strides = [1, 1]} : vector<8x5xf32> to vector<8x1xf32>
    %434 = vector.broadcast %433 : vector<8x1xf32> to vector<8x16xf32>
    %435 = arith.mulf %434, %338 : vector<8x16xf32>
    %436 = vector.extract_strided_slice %432 {offsets = [0, 1], sizes = [8, 1], strides = [1, 1]} : vector<8x5xf32> to vector<8x1xf32>
    %437 = vector.broadcast %436 : vector<8x1xf32> to vector<8x16xf32>
    %438 = arith.mulf %437, %358 : vector<8x16xf32>
    %439 = arith.addf %435, %438 : vector<8x16xf32>
    %440 = vector.extract_strided_slice %432 {offsets = [0, 2], sizes = [8, 1], strides = [1, 1]} : vector<8x5xf32> to vector<8x1xf32>
    %441 = vector.broadcast %440 : vector<8x1xf32> to vector<8x16xf32>
    %442 = arith.mulf %441, %378 : vector<8x16xf32>
    %443 = arith.addf %439, %442 : vector<8x16xf32>
    %444 = vector.extract_strided_slice %432 {offsets = [0, 3], sizes = [8, 1], strides = [1, 1]} : vector<8x5xf32> to vector<8x1xf32>
    %445 = vector.broadcast %444 : vector<8x1xf32> to vector<8x16xf32>
    %446 = arith.mulf %445, %398 : vector<8x16xf32>
    %447 = arith.addf %443, %446 : vector<8x16xf32>
    %448 = vector.extract_strided_slice %432 {offsets = [0, 4], sizes = [8, 1], strides = [1, 1]} : vector<8x5xf32> to vector<8x1xf32>
    %449 = vector.broadcast %448 : vector<8x1xf32> to vector<8x16xf32>
    %450 = arith.mulf %449, %418 : vector<8x16xf32>
    %451 = arith.addf %447, %450 : vector<8x16xf32>
    %cst_49 = arith.constant dense<0.000000e+00> : vector<8x8xf32>
    %452 = tpu.matmul %451, %318, %cst_49 {dimension_numbers = #tpu.dot_dimension_numbers<[1], [0], [0], [1], [0, 0, 1, 1], [], []>} : vector<8x16xf32>, vector<16x8xf32>, vector<8x8xf32> -> vector<8x8xf32>
    %c0_50 = arith.constant 0 : index
    %c24 = arith.constant 24 : index
    %453 = vector.load %arg16[%c0_50, %c24] : memref<16x32xf32, #tpu.memory_space<vmem>>, vector<16x8xf32>
    %c0_51 = arith.constant 0 : index
    %c24_52 = arith.constant 24 : index
    %454 = vector.load %arg17[%c0_51, %c24_52] : memref<16x32xf32, #tpu.memory_space<vmem>>, vector<16x8xf32>
    %455 = vector.extract_strided_slice %16 {offsets = [0, 24], sizes = [8, 8], strides = [1, 1]} : vector<8x32xf32> to vector<8x8xf32>
    %456 = tpu.transpose %453, [1, 0] : vector<16x8xf32> -> vector<8x16xf32>
    %cst_53 = arith.constant dense<0.000000e+00> : vector<8x16xf32>
    %457 = tpu.matmul %455, %456, %cst_53 {dimension_numbers = #tpu.dot_dimension_numbers<[1], [0], [0], [1], [0, 0, 1, 1], [], []>} : vector<8x8xf32>, vector<8x16xf32>, vector<8x16xf32> -> vector<8x16xf32>
    %458 = vector.extract_strided_slice %42 {offsets = [0, 15], sizes = [8, 1], strides = [1, 1]} : vector<8x20xf32> to vector<8x1xf32>
    %459 = vector.extract_strided_slice %35 {offsets = [0, 15], sizes = [8, 1], strides = [1, 1]} : vector<8x20xf32> to vector<8x1xf32>
    %460 = vector.broadcast %459 : vector<8x1xf32> to vector<8x16xf32>
    %461 = arith.cmpf oeq, %44, %460 : vector<8x16xf32>
    %462 = arith.extui %461 : vector<8x16xi1> to vector<8x16xi32>
    %463 = arith.sitofp %462 : vector<8x16xi32> to vector<8x16xf32>
    %464 = vector.broadcast %458 : vector<8x1xf32> to vector<8x16xf32>
    %465 = arith.mulf %464, %463 : vector<8x16xf32>
    %466 = vector.extract_strided_slice %40 {offsets = [0, 15], sizes = [8, 1], strides = [1, 1]} : vector<8x20xf32> to vector<8x1xf32>
    %467 = vector.extract_strided_slice %37 {offsets = [0, 15], sizes = [8, 1], strides = [1, 1]} : vector<8x20xf32> to vector<8x1xf32>
    %468 = vector.broadcast %467 : vector<8x1xf32> to vector<8x16xf32>
    %469 = arith.cmpf oeq, %44, %468 : vector<8x16xf32>
    %470 = arith.extui %469 : vector<8x16xi1> to vector<8x16xi32>
    %471 = arith.sitofp %470 : vector<8x16xi32> to vector<8x16xf32>
    %472 = vector.broadcast %466 : vector<8x1xf32> to vector<8x16xf32>
    %473 = arith.mulf %472, %471 : vector<8x16xf32>
    %474 = arith.addf %465, %473 : vector<8x16xf32>
    %475 = arith.mulf %474, %457 : vector<8x16xf32>
    %cst_54 = arith.constant dense<0.000000e+00> : vector<8xf32>
    %476 = vector.multi_reduction <add>, %475, %cst_54 [1] : vector<8x16xf32> to vector<8xf32>
    %477 = vector.shape_cast %476 : vector<8xf32> to vector<8x1xf32>
    %478 = vector.extract_strided_slice %42 {offsets = [0, 16], sizes = [8, 1], strides = [1, 1]} : vector<8x20xf32> to vector<8x1xf32>
    %479 = vector.extract_strided_slice %35 {offsets = [0, 16], sizes = [8, 1], strides = [1, 1]} : vector<8x20xf32> to vector<8x1xf32>
    %480 = vector.broadcast %479 : vector<8x1xf32> to vector<8x16xf32>
    %481 = arith.cmpf oeq, %44, %480 : vector<8x16xf32>
    %482 = arith.extui %481 : vector<8x16xi1> to vector<8x16xi32>
    %483 = arith.sitofp %482 : vector<8x16xi32> to vector<8x16xf32>
    %484 = vector.broadcast %478 : vector<8x1xf32> to vector<8x16xf32>
    %485 = arith.mulf %484, %483 : vector<8x16xf32>
    %486 = vector.extract_strided_slice %40 {offsets = [0, 16], sizes = [8, 1], strides = [1, 1]} : vector<8x20xf32> to vector<8x1xf32>
    %487 = vector.extract_strided_slice %37 {offsets = [0, 16], sizes = [8, 1], strides = [1, 1]} : vector<8x20xf32> to vector<8x1xf32>
    %488 = vector.broadcast %487 : vector<8x1xf32> to vector<8x16xf32>
    %489 = arith.cmpf oeq, %44, %488 : vector<8x16xf32>
    %490 = arith.extui %489 : vector<8x16xi1> to vector<8x16xi32>
    %491 = arith.sitofp %490 : vector<8x16xi32> to vector<8x16xf32>
    %492 = vector.broadcast %486 : vector<8x1xf32> to vector<8x16xf32>
    %493 = arith.mulf %492, %491 : vector<8x16xf32>
    %494 = arith.addf %485, %493 : vector<8x16xf32>
    %495 = arith.mulf %494, %457 : vector<8x16xf32>
    %cst_55 = arith.constant dense<0.000000e+00> : vector<8xf32>
    %496 = vector.multi_reduction <add>, %495, %cst_55 [1] : vector<8x16xf32> to vector<8xf32>
    %497 = vector.shape_cast %496 : vector<8xf32> to vector<8x1xf32>
    %498 = vector.extract_strided_slice %42 {offsets = [0, 17], sizes = [8, 1], strides = [1, 1]} : vector<8x20xf32> to vector<8x1xf32>
    %499 = vector.extract_strided_slice %35 {offsets = [0, 17], sizes = [8, 1], strides = [1, 1]} : vector<8x20xf32> to vector<8x1xf32>
    %500 = vector.broadcast %499 : vector<8x1xf32> to vector<8x16xf32>
    %501 = arith.cmpf oeq, %44, %500 : vector<8x16xf32>
    %502 = arith.extui %501 : vector<8x16xi1> to vector<8x16xi32>
    %503 = arith.sitofp %502 : vector<8x16xi32> to vector<8x16xf32>
    %504 = vector.broadcast %498 : vector<8x1xf32> to vector<8x16xf32>
    %505 = arith.mulf %504, %503 : vector<8x16xf32>
    %506 = vector.extract_strided_slice %40 {offsets = [0, 17], sizes = [8, 1], strides = [1, 1]} : vector<8x20xf32> to vector<8x1xf32>
    %507 = vector.extract_strided_slice %37 {offsets = [0, 17], sizes = [8, 1], strides = [1, 1]} : vector<8x20xf32> to vector<8x1xf32>
    %508 = vector.broadcast %507 : vector<8x1xf32> to vector<8x16xf32>
    %509 = arith.cmpf oeq, %44, %508 : vector<8x16xf32>
    %510 = arith.extui %509 : vector<8x16xi1> to vector<8x16xi32>
    %511 = arith.sitofp %510 : vector<8x16xi32> to vector<8x16xf32>
    %512 = vector.broadcast %506 : vector<8x1xf32> to vector<8x16xf32>
    %513 = arith.mulf %512, %511 : vector<8x16xf32>
    %514 = arith.addf %505, %513 : vector<8x16xf32>
    %515 = arith.mulf %514, %457 : vector<8x16xf32>
    %cst_56 = arith.constant dense<0.000000e+00> : vector<8xf32>
    %516 = vector.multi_reduction <add>, %515, %cst_56 [1] : vector<8x16xf32> to vector<8xf32>
    %517 = vector.shape_cast %516 : vector<8xf32> to vector<8x1xf32>
    %518 = vector.extract_strided_slice %42 {offsets = [0, 18], sizes = [8, 1], strides = [1, 1]} : vector<8x20xf32> to vector<8x1xf32>
    %519 = vector.extract_strided_slice %35 {offsets = [0, 18], sizes = [8, 1], strides = [1, 1]} : vector<8x20xf32> to vector<8x1xf32>
    %520 = vector.broadcast %519 : vector<8x1xf32> to vector<8x16xf32>
    %521 = arith.cmpf oeq, %44, %520 : vector<8x16xf32>
    %522 = arith.extui %521 : vector<8x16xi1> to vector<8x16xi32>
    %523 = arith.sitofp %522 : vector<8x16xi32> to vector<8x16xf32>
    %524 = vector.broadcast %518 : vector<8x1xf32> to vector<8x16xf32>
    %525 = arith.mulf %524, %523 : vector<8x16xf32>
    %526 = vector.extract_strided_slice %40 {offsets = [0, 18], sizes = [8, 1], strides = [1, 1]} : vector<8x20xf32> to vector<8x1xf32>
    %527 = vector.extract_strided_slice %37 {offsets = [0, 18], sizes = [8, 1], strides = [1, 1]} : vector<8x20xf32> to vector<8x1xf32>
    %528 = vector.broadcast %527 : vector<8x1xf32> to vector<8x16xf32>
    %529 = arith.cmpf oeq, %44, %528 : vector<8x16xf32>
    %530 = arith.extui %529 : vector<8x16xi1> to vector<8x16xi32>
    %531 = arith.sitofp %530 : vector<8x16xi32> to vector<8x16xf32>
    %532 = vector.broadcast %526 : vector<8x1xf32> to vector<8x16xf32>
    %533 = arith.mulf %532, %531 : vector<8x16xf32>
    %534 = arith.addf %525, %533 : vector<8x16xf32>
    %535 = arith.mulf %534, %457 : vector<8x16xf32>
    %cst_57 = arith.constant dense<0.000000e+00> : vector<8xf32>
    %536 = vector.multi_reduction <add>, %535, %cst_57 [1] : vector<8x16xf32> to vector<8xf32>
    %537 = vector.shape_cast %536 : vector<8xf32> to vector<8x1xf32>
    %538 = vector.extract_strided_slice %42 {offsets = [0, 19], sizes = [8, 1], strides = [1, 1]} : vector<8x20xf32> to vector<8x1xf32>
    %539 = vector.extract_strided_slice %35 {offsets = [0, 19], sizes = [8, 1], strides = [1, 1]} : vector<8x20xf32> to vector<8x1xf32>
    %540 = vector.broadcast %539 : vector<8x1xf32> to vector<8x16xf32>
    %541 = arith.cmpf oeq, %44, %540 : vector<8x16xf32>
    %542 = arith.extui %541 : vector<8x16xi1> to vector<8x16xi32>
    %543 = arith.sitofp %542 : vector<8x16xi32> to vector<8x16xf32>
    %544 = vector.broadcast %538 : vector<8x1xf32> to vector<8x16xf32>
    %545 = arith.mulf %544, %543 : vector<8x16xf32>
    %546 = vector.extract_strided_slice %40 {offsets = [0, 19], sizes = [8, 1], strides = [1, 1]} : vector<8x20xf32> to vector<8x1xf32>
    %547 = vector.extract_strided_slice %37 {offsets = [0, 19], sizes = [8, 1], strides = [1, 1]} : vector<8x20xf32> to vector<8x1xf32>
    %548 = vector.broadcast %547 : vector<8x1xf32> to vector<8x16xf32>
    %549 = arith.cmpf oeq, %44, %548 : vector<8x16xf32>
    %550 = arith.extui %549 : vector<8x16xi1> to vector<8x16xi32>
    %551 = arith.sitofp %550 : vector<8x16xi32> to vector<8x16xf32>
    %552 = vector.broadcast %546 : vector<8x1xf32> to vector<8x16xf32>
    %553 = arith.mulf %552, %551 : vector<8x16xf32>
    %554 = arith.addf %545, %553 : vector<8x16xf32>
    %555 = arith.mulf %554, %457 : vector<8x16xf32>
    %cst_58 = arith.constant dense<0.000000e+00> : vector<8xf32>
    %556 = vector.multi_reduction <add>, %555, %cst_58 [1] : vector<8x16xf32> to vector<8xf32>
    %557 = vector.shape_cast %556 : vector<8xf32> to vector<8x1xf32>
    %558 = tpu.concatenate %477, %497, %517, %537, %557 in 1 : vector<8x1xf32>, vector<8x1xf32>, vector<8x1xf32>, vector<8x1xf32>, vector<8x1xf32> -> vector<8x5xf32>
    %cst_59 = arith.constant dense<0xFF800000> : vector<8xf32>
    %559 = vector.multi_reduction <maximumf>, %558, %cst_59 [1] : vector<8x5xf32> to vector<8xf32>
    %560 = vector.shape_cast %559 : vector<8xf32> to vector<8x1xf32>
    %561 = vector.broadcast %560 : vector<8x1xf32> to vector<8x5xf32>
    %562 = arith.subf %558, %561 : vector<8x5xf32>
    %563 = math.exp %562 : vector<8x5xf32>
    %cst_60 = arith.constant dense<0.000000e+00> : vector<8xf32>
    %564 = vector.multi_reduction <add>, %563, %cst_60 [1] : vector<8x5xf32> to vector<8xf32>
    %565 = vector.shape_cast %564 : vector<8xf32> to vector<8x1xf32>
    %566 = tpu.reciprocal %565 {approx = true} : vector<8x1xf32> -> vector<8x1xf32>
    %567 = vector.broadcast %566 : vector<8x1xf32> to vector<8x5xf32>
    %568 = arith.mulf %563, %567 : vector<8x5xf32>
    %569 = vector.extract_strided_slice %568 {offsets = [0, 0], sizes = [8, 1], strides = [1, 1]} : vector<8x5xf32> to vector<8x1xf32>
    %570 = vector.broadcast %569 : vector<8x1xf32> to vector<8x16xf32>
    %571 = arith.mulf %570, %474 : vector<8x16xf32>
    %572 = vector.extract_strided_slice %568 {offsets = [0, 1], sizes = [8, 1], strides = [1, 1]} : vector<8x5xf32> to vector<8x1xf32>
    %573 = vector.broadcast %572 : vector<8x1xf32> to vector<8x16xf32>
    %574 = arith.mulf %573, %494 : vector<8x16xf32>
    %575 = arith.addf %571, %574 : vector<8x16xf32>
    %576 = vector.extract_strided_slice %568 {offsets = [0, 2], sizes = [8, 1], strides = [1, 1]} : vector<8x5xf32> to vector<8x1xf32>
    %577 = vector.broadcast %576 : vector<8x1xf32> to vector<8x16xf32>
    %578 = arith.mulf %577, %514 : vector<8x16xf32>
    %579 = arith.addf %575, %578 : vector<8x16xf32>
    %580 = vector.extract_strided_slice %568 {offsets = [0, 3], sizes = [8, 1], strides = [1, 1]} : vector<8x5xf32> to vector<8x1xf32>
    %581 = vector.broadcast %580 : vector<8x1xf32> to vector<8x16xf32>
    %582 = arith.mulf %581, %534 : vector<8x16xf32>
    %583 = arith.addf %579, %582 : vector<8x16xf32>
    %584 = vector.extract_strided_slice %568 {offsets = [0, 4], sizes = [8, 1], strides = [1, 1]} : vector<8x5xf32> to vector<8x1xf32>
    %585 = vector.broadcast %584 : vector<8x1xf32> to vector<8x16xf32>
    %586 = arith.mulf %585, %554 : vector<8x16xf32>
    %587 = arith.addf %583, %586 : vector<8x16xf32>
    %cst_61 = arith.constant dense<0.000000e+00> : vector<8x8xf32>
    %588 = tpu.matmul %587, %454, %cst_61 {dimension_numbers = #tpu.dot_dimension_numbers<[1], [0], [0], [1], [0, 0, 1, 1], [], []>} : vector<8x16xf32>, vector<16x8xf32>, vector<8x8xf32> -> vector<8x8xf32>
    %589 = tpu.concatenate %180, %316, %452, %588 in 1 : vector<8x8xf32>, vector<8x8xf32>, vector<8x8xf32>, vector<8x8xf32> -> vector<8x32xf32>
    %c0_62 = arith.constant 0 : index
    %c0_63 = arith.constant 0 : index
    %590 = vector.load %arg13[%c0_62, %c0_63] : memref<32x32xf32, #tpu.memory_space<vmem>>, vector<32x32xf32>
    %cst_64 = arith.constant dense<0.000000e+00> : vector<8x32xf32>
    %591 = tpu.matmul %589, %590, %cst_64 {dimension_numbers = #tpu.dot_dimension_numbers<[1], [0], [0], [1], [0, 0, 1, 1], [], []>} : vector<8x32xf32>, vector<32x32xf32>, vector<8x32xf32> -> vector<8x32xf32>
    %c0_65 = arith.constant 0 : index
    %c0_66 = arith.constant 0 : index
    %592 = vector.load %arg14[%c0_65, %c0_66] : memref<1x32xf32, #tpu.memory_space<vmem>>, vector<1x32xf32>
    %593 = vector.broadcast %592 : vector<1x32xf32> to vector<8x32xf32>
    %594 = arith.addf %591, %593 : vector<8x32xf32>
    %c0_67 = arith.constant 0 : index
    %c0_68 = arith.constant 0 : index
    %c0_69 = arith.constant 0 : index
    %595 = vector.load %arg15[%c0_67, %c0_68, %c0_69] : memref<1x8x32xf32, #tpu.memory_space<vmem>>, vector<1x8x32xf32>
    %596 = vector.shape_cast %595 : vector<1x8x32xf32> to vector<8x32xf32>
    %597 = vector.shape_cast %594 : vector<8x32xf32> to vector<1x8x32xf32>
    tpu.vector_store %arg15[%c0_67, %c0_68, %c0_69], %597 {strides = array<i32>} : memref<1x8x32xf32, #tpu.memory_space<vmem>>, vector<1x8x32xf32>,
    return
  }
  func.func @transform_0(%arg0: i32, %arg1: i32) -> i32 {
    %c0_i32 = arith.constant 0 : i32
    %c0_i32_0 = arith.constant 0 : i32
    return %c0_i32 : i32
  }
  func.func @transform_1(%arg0: i32, %arg1: i32) -> i32 {
    %c0_i32 = arith.constant 0 : i32
    %c0_i32_0 = arith.constant 0 : i32
    return %c0_i32 : i32
  }
  func.func @transform_2(%arg0: i32, %arg1: i32) -> (i32, i32, i32) {
    %c0_i32 = arith.constant 0 : i32
    %c0_i32_0 = arith.constant 0 : i32
    %c0_i32_1 = arith.constant 0 : i32
    return %arg0, %c0_i32, %c0_i32_0 : i32, i32, i32
  }
  func.func @transform_3(%arg0: i32, %arg1: i32) -> (i32, i32, i32) {
    %c0_i32 = arith.constant 0 : i32
    %c0_i32_0 = arith.constant 0 : i32
    %c0_i32_1 = arith.constant 0 : i32
    return %arg0, %c0_i32, %c0_i32_0 : i32, i32, i32
  }
  func.func @transform_4(%arg0: i32, %arg1: i32) -> (i32, i32, i32) {
    %c0_i32 = arith.constant 0 : i32
    %c0_i32_0 = arith.constant 0 : i32
    return %arg0, %arg1, %c0_i32 : i32, i32, i32
  }
  func.func @transform_5(%arg0: i32, %arg1: i32) -> (i32, i32) {
    %c0_i32 = arith.constant 0 : i32
    %c0_i32_0 = arith.constant 0 : i32
    %c0_i32_1 = arith.constant 0 : i32
    return %c0_i32, %c0_i32_0 : i32, i32
  }
  func.func @transform_6(%arg0: i32, %arg1: i32) -> (i32, i32) {
    %c0_i32 = arith.constant 0 : i32
    %c0_i32_0 = arith.constant 0 : i32
    %c0_i32_1 = arith.constant 0 : i32
    return %c0_i32, %c0_i32_0 : i32, i32
  }
  func.func @transform_7(%arg0: i32, %arg1: i32) -> (i32, i32) {
    %c0_i32 = arith.constant 0 : i32
    %c0_i32_0 = arith.constant 0 : i32
    %c0_i32_1 = arith.constant 0 : i32
    return %c0_i32, %c0_i32_0 : i32, i32
  }
  func.func @transform_8(%arg0: i32, %arg1: i32) -> (i32, i32) {
    %c0_i32 = arith.constant 0 : i32
    %c0_i32_0 = arith.constant 0 : i32
    %c0_i32_1 = arith.constant 0 : i32
    return %c0_i32, %c0_i32_0 : i32, i32
  }
  func.func @transform_9(%arg0: i32, %arg1: i32) -> (i32, i32) {
    %c0_i32 = arith.constant 0 : i32
    %c0_i32_0 = arith.constant 0 : i32
    %c0_i32_1 = arith.constant 0 : i32
    return %c0_i32, %c0_i32_0 : i32, i32
  }
  func.func @transform_10(%arg0: i32, %arg1: i32) -> (i32, i32) {
    %c0_i32 = arith.constant 0 : i32
    %c0_i32_0 = arith.constant 0 : i32
    %c0_i32_1 = arith.constant 0 : i32
    return %c0_i32, %c0_i32_0 : i32, i32
  }
  func.func @transform_11(%arg0: i32, %arg1: i32) -> (i32, i32) {
    %c0_i32 = arith.constant 0 : i32
    %c0_i32_0 = arith.constant 0 : i32
    %c0_i32_1 = arith.constant 0 : i32
    return %c0_i32, %c0_i32_0 : i32, i32
  }
  func.func @transform_12(%arg0: i32, %arg1: i32) -> (i32, i32) {
    %c0_i32 = arith.constant 0 : i32
    %c0_i32_0 = arith.constant 0 : i32
    %c0_i32_1 = arith.constant 0 : i32
    return %c0_i32, %c0_i32_0 : i32, i32
  }
  func.func @transform_13(%arg0: i32, %arg1: i32) -> (i32, i32, i32) {
    %c0_i32 = arith.constant 0 : i32
    %c0_i32_0 = arith.constant 0 : i32
    return %arg0, %arg1, %c0_i32 : i32, i32, i32
  }
}

</mosaic_0001>

<llo_original>
// kernel: tpu_custom_call.1
$region0: #{tpu_custom_call.1}
  #allocation0 [shape = 'u32[]', space=smem, size = 0x4, offset = 0x4, fixed_abs, tag = 'smem constant byte address 0x4 - core index']
  #allocation1 [shape = 'u32[72,128]{1,0:T(1,128)}', space=vmem, size = 0x9000, scoped, tag = 'internal scratch']
  #allocation2 [shape = 'f32[16,32]{1,0:T(8,128)}', space=vmem, size = 0x2000, scoped, tag = 'scratch operand']
  #allocation3 [shape = 'f32[16,32]{1,0:T(8,128)}', space=vmem, size = 0x2000, scoped, tag = 'scratch operand']
  %s0 = inlined_call_operand.hbm [shape: f32[2], index: 0, kind: input, shape index: {}]
  %s1 = inlined_call_operand.hbm [shape: f32[2], index: 1, kind: input, shape index: {}]
  %s2 = inlined_call_operand.hbm [shape: f32[2,16,32], index: 2, kind: input, shape index: {}]
  %s3 = inlined_call_operand.hbm [shape: f32[2,16,32], index: 3, kind: input, shape index: {}]
  %s4 = inlined_call_operand.hbm [shape: f32[2,16,32], index: 4, kind: input, shape index: {}]
  %s5 = inlined_call_operand.hbm [shape: f32[32,32], index: 5, kind: input, shape index: {}]
  %s6 = inlined_call_operand.vmem [shape: f32[1,32], index: 6, kind: input, shape index: {}]
  %s7 = inlined_call_operand.hbm [shape: f32[32,32], index: 7, kind: input, shape index: {}]
  %s8 = inlined_call_operand.vmem [shape: f32[1,32], index: 8, kind: input, shape index: {}]
  %s9 = inlined_call_operand.hbm [shape: f32[32,52], index: 9, kind: input, shape index: {}]
  %s10 = inlined_call_operand.vmem [shape: f32[1,52], index: 10, kind: input, shape index: {}]
  %s11 = inlined_call_operand.hbm [shape: f32[32,32], index: 11, kind: input, shape index: {}]
  %s12 = inlined_call_operand.vmem [shape: f32[1,32], index: 12, kind: input, shape index: {}]
  %s13 = inlined_call_operand.hbm [shape: f32[2,16,32], index: 13, kind: output, shape index: {}]
  %s14 = sld [smem:[#allocation0]]
  $region125: #{tpu_custom_call.1} parent=0
    _
  %s16 = ssub.s32 1, %s14
  %s17 = scalar_select 0, %s16, %s14
  $region1: #{tpu_custom_call.1} parent=0
    #allocation4 [shape = 'u8[512]{0}', space=smem, size = 0x200, scoped, tag = 'input window, operand 0, single buffered']
    #allocation5 [shape = 's32[2]{0}', space=sflag, size = 0x8, scoped, tag = 'scoped memory for tpu_custom_call.1']
    #allocation6 [shape = 's32[2]{0}', space=sflag, size = 0x8, scoped, tag = 'scoped memory for tpu_custom_call.1']
    #allocation7 [shape = 's32[2]{0}', space=sflag, size = 0x8, scoped, tag = 'scoped memory for tpu_custom_call.1']
    #allocation8 [shape = 'u8[512]{0}', space=smem, size = 0x200, scoped, tag = 'input window, operand 1, single buffered']
    #allocation9 [shape = 's32[1]{0}', space=sflag, size = 0x4, scoped, tag = 'scoped memory for tpu_custom_call.1']
    #allocation10 [shape = 'u8[16384]{0}', space=vmem, size = 0x4000, scoped, tag = 'input window, operand 2']
    #allocation11 [shape = 'u8[16384]{0}', space=vmem, size = 0x4000, scoped, tag = 'input window, operand 3']
    #allocation12 [shape = 's32[2]{0}', space=sflag, size = 0x8, scoped, tag = 'scoped memory for tpu_custom_call.1']
    #allocation13 [shape = 'u8[8192]{0}', space=vmem, size = 0x2000, scoped, tag = 'input window, operand 4']
    #allocation14 [shape = 'u8[16384]{0}', space=vmem, size = 0x4000, scoped, tag = 'input window, operand 5, single buffered']
    #allocation15 [shape = 's32[1]{0}', space=sflag, size = 0x4, scoped, tag = 'scoped memory for tpu_custom_call.1']
    #allocation16 [shape = 'u8[16384]{0}', space=vmem, size = 0x4000, scoped, tag = 'input window, operand 7, single buffered']
    #allocation17 [shape = 'u8[16384]{0}', space=vmem, size = 0x4000, scoped, tag = 'input window, operand 9, single buffered']
    #allocation18 [shape = 's32[1]{0}', space=sflag, size = 0x4, scoped, tag = 'scoped memory for tpu_custom_call.1']
    #allocation19 [shape = 'u8[16384]{0}', space=vmem, size = 0x4000, scoped, tag = 'input window, operand 11, single buffered']
    #allocation20 [shape = 'u8[8192]{0}', space=vmem, size = 0x2000, scoped, tag = 'output window, operand 0']
    %18 = vsyncpa [#allocation7], 0
    %19 = vsyncpa [#allocation9], 0
    %20 = vsyncpa [#allocation5], 0
    %s21 = scalar_lea.sflag [#allocation5], 1
    %22 = vsyncpa %s21, 0
    %23 = vsyncpa [#allocation12], 0
    %s24 = scalar_lea.sflag [#allocation12], 1
    %25 = vsyncpa %s24, 0
    %26 = vsyncpa [#allocation15], 0
    %27 = vsyncpa [#allocation18], 0
    %28 = vsyncpa [#allocation6], 0
    %s29 = scalar_lea.sflag [#allocation6], 1
    %30 = vsyncpa %s29, 0
    loop: start=0, step=1, limit=6
    $region2: #{tpu_custom_call.1} parent=1 // loop_pre_header
      _
    $region3: #{tpu_custom_call.1} parent=1 // loop_header
      %s32 = sphi 0, %s36
      %p33 = scmp.ge.s32.totalorder %s32, 6
      %s39 = sphi 0, %s51
      %s40 = sphi 0, %s47
      %s41 = sphi 0, %s39
      %s42 = sphi 0, %s40
      %s43 = sphi 0, %s41
      %s44 = sphi 0, %s42
      %s52 = sphi 0, %s52
      %s54 = sphi 0, %s52
      %s55 = sphi 0, %s54
      %s69 = sphi 0, %s55
      %s73 = sphi 0, %s73
      %s75 = sphi 0, %s73
      %s76 = sphi 0, %s75
      %s90 = sphi 0, %s76
      %s96 = sphi 0, %s98
      %s99 = sphi 0, %s96
      %s100 = sphi 0, %s99
      %s116 = sphi 0, %s100
      %s122 = sphi 0, %s124
      %s125 = sphi 0, %s122
      %s126 = sphi 0, %s125
      %s142 = sphi 0, %s126
      %s150 = sphi 0, %s152
      %s153 = sphi 0, %s150
      %s154 = sphi 0, %s153
      %s170 = sphi 0, %s154
      %s174 = sphi 0, %s174
      %s176 = sphi 0, %s174
      %s177 = sphi 0, %s176
      %s191 = sphi 0, %s177
      %s195 = sphi 0, %s195
      %s197 = sphi 0, %s195
      %s198 = sphi 0, %s197
      %s212 = sphi 0, %s198
      %s216 = sphi 0, %s216
      %s218 = sphi 0, %s216
      %s219 = sphi 0, %s218
      %s233 = sphi 0, %s219
      %s237 = sphi 0, %s237
      %s239 = sphi 0, %s237
      %s240 = sphi 0, %s239
      %s254 = sphi 0, %s240
      %s258 = sphi 0, %s258
      %s260 = sphi 0, %s258
      %s261 = sphi 0, %s260
      %s275 = sphi 0, %s261
      %s279 = sphi 0, %s279
      %s281 = sphi 0, %s279
      %s282 = sphi 0, %s281
      %s296 = sphi 0, %s282
      %s300 = sphi 0, %s300
      %s302 = sphi 0, %s300
      %s303 = sphi 0, %s302
      %s317 = sphi 0, %s303
      %s321 = sphi 0, %s321
      %s323 = sphi 0, %s321
      %s324 = sphi 0, %s323
      %s338 = sphi 0, %s324
      %s346 = sphi 0, %s348
      %s349 = sphi 0, %s346
      %s350 = sphi 0, %s349
      %s366 = sphi 0, %s350
    $region4: #{tpu_custom_call.1} parent=1 // loop_header_branch
      %35 = sbr.rel (%p33) target = $region8
    $region5: #{tpu_custom_call.1} parent=1 // loop_body
      %s37 = ssub.s32 %s32, 1
      %s38 = ssub.s32 %s32, 2
      %s45 = sadd.s32 1, %s40
      %p46 = scmp.ge.s32.totalorder %s45, 2
      %s47 = scalar_select %p46, 0, %s45
      %s48 = sadd.s32 1, %s39
      %s49 = scalar_select %p46, %s48, %s39
      %p50 = scmp.ge.s32.totalorder %s49, 2
      %s51 = scalar_select %p50, 0, %s49
      %s53 = sadd.s32 %s52, 1
      %p56 = scmp.eq.s32.totalorder %s32, 3
      %p57 = scmp.ne.s32.totalorder %s52, %s54
      %p58 = scmp.eq.s32.totalorder %s32, 0
      %p59 = por %p57, %p58
      %p60 = scmp.ne.s32.totalorder %s52, %s54
      %p61 = scmp.eq.s32.totalorder %s37, 3
      %p62 = por %p60, %p61
      %p63 = scmp.ne.s32.totalorder %s54, %s55
      %p64 = scmp.eq.s32.totalorder %s37, 0
      %p65 = por %p63, %p64
      %p66 = scmp.ne.s32.totalorder %s54, %s55
      %p67 = scmp.eq.s32.totalorder %s38, 3
      %p68 = por %p66, %p67
      %p70 = scmp.ne.s32.totalorder %s55, %s69
      %p71 = scmp.eq.s32.totalorder %s38, 0
      %p72 = por %p70, %p71
      %s74 = sadd.s32 %s73, 1
      %p77 = scmp.eq.s32.totalorder %s32, 3
      %p78 = scmp.ne.s32.totalorder %s73, %s75
      %p79 = scmp.eq.s32.totalorder %s32, 0
      %p80 = por %p78, %p79
      %p81 = scmp.ne.s32.totalorder %s73, %s75
      %p82 = scmp.eq.s32.totalorder %s37, 3
      %p83 = por %p81, %p82
      %p84 = scmp.ne.s32.totalorder %s75, %s76
      %p85 = scmp.eq.s32.totalorder %s37, 0
      %p86 = por %p84, %p85
      %p87 = scmp.ne.s32.totalorder %s75, %s76
      %p88 = scmp.eq.s32.totalorder %s38, 3
      %p89 = por %p87, %p88
      %p91 = scmp.ne.s32.totalorder %s76, %s90
      %p92 = scmp.eq.s32.totalorder %s38, 0
      %p93 = por %p91, %p92
      %s94 = ssub.s32 %s39, %s51
      %p95 = scmp.eq.s32.totalorder %s94, 0
      %s97 = sadd.s32 %s96, 1
      %s98 = scalar_select %p95, %s96, %s97
      %p101 = pneg %p95
      %p102 = scmp.eq.s32.totalorder %s32, 3
      %p103 = por %p101, %p102
      %p104 = scmp.ne.s32.totalorder %s96, %s99
      %p105 = scmp.eq.s32.totalorder %s32, 0
      %p106 = por %p104, %p105
      %p107 = scmp.ne.s32.totalorder %s96, %s99
      %p108 = scmp.eq.s32.totalorder %s37, 3
      %p109 = por %p107, %p108
      %p110 = scmp.ne.s32.totalorder %s99, %s100
      %p111 = scmp.eq.s32.totalorder %s37, 0
      %p112 = por %p110, %p111
      %p113 = scmp.ne.s32.totalorder %s99, %s100
      %p114 = scmp.eq.s32.totalorder %s38, 3
      %p115 = por %p113, %p114
      %p117 = scmp.ne.s32.totalorder %s100, %s116
      %p118 = scmp.eq.s32.totalorder %s38, 0
      %p119 = por %p117, %p118
      %s120 = ssub.s32 %s39, %s51
      %p121 = scmp.eq.s32.totalorder %s120, 0
      %s123 = sadd.s32 %s122, 1
      %s124 = scalar_select %p121, %s122, %s123
      %p127 = pneg %p121
      %p128 = scmp.eq.s32.totalorder %s32, 3
      %p129 = por %p127, %p128
      %p130 = scmp.ne.s32.totalorder %s122, %s125
      %p131 = scmp.eq.s32.totalorder %s32, 0
      %p132 = por %p130, %p131
      %p133 = scmp.ne.s32.totalorder %s122, %s125
      %p134 = scmp.eq.s32.totalorder %s37, 3
      %p135 = por %p133, %p134
      %p136 = scmp.ne.s32.totalorder %s125, %s126
      %p137 = scmp.eq.s32.totalorder %s37, 0
      %p138 = por %p136, %p137
      %p139 = scmp.ne.s32.totalorder %s125, %s126
      %p140 = scmp.eq.s32.totalorder %s38, 3
      %p141 = por %p139, %p140
      %p143 = scmp.ne.s32.totalorder %s126, %s142
      %p144 = scmp.eq.s32.totalorder %s38, 0
      %p145 = por %p143, %p144
      %s146 = ssub.s32 %s39, %s51
      %s147 = ssub.s32 %s40, %s47
      %s148 = sor.u32 %s146, %s147
      %p149 = scmp.eq.s32.totalorder %s148, 0
      %s151 = sadd.s32 %s150, 1
      %s152 = scalar_select %p149, %s150, %s151
      %p155 = pneg %p149
      %p156 = scmp.eq.s32.totalorder %s32, 3
      %p157 = por %p155, %p156
      %p158 = scmp.ne.s32.totalorder %s150, %s153
      %p159 = scmp.eq.s32.totalorder %s32, 0
      %p160 = por %p158, %p159
      %p161 = scmp.ne.s32.totalorder %s150, %s153
      %p162 = scmp.eq.s32.totalorder %s37, 3
      %p163 = por %p161, %p162
      %p164 = scmp.ne.s32.totalorder %s153, %s154
      %p165 = scmp.eq.s32.totalorder %s37, 0
      %p166 = por %p164, %p165
      %p167 = scmp.ne.s32.totalorder %s153, %s154
      %p168 = scmp.eq.s32.totalorder %s38, 3
      %p169 = por %p167, %p168
      %p171 = scmp.ne.s32.totalorder %s154, %s170
      %p172 = scmp.eq.s32.totalorder %s38, 0
      %p173 = por %p171, %p172
      %s175 = sadd.s32 %s174, 1
      %p178 = scmp.eq.s32.totalorder %s32, 3
      %p179 = scmp.ne.s32.totalorder %s174, %s176
      %p180 = scmp.eq.s32.totalorder %s32, 0
      %p181 = por %p179, %p180
      %p182 = scmp.ne.s32.totalorder %s174, %s176
      %p183 = scmp.eq.s32.totalorder %s37, 3
      %p184 = por %p182, %p183
      %p185 = scmp.ne.s32.totalorder %s176, %s177
      %p186 = scmp.eq.s32.totalorder %s37, 0
      %p187 = por %p185, %p186
      %p188 = scmp.ne.s32.totalorder %s176, %s177
      %p189 = scmp.eq.s32.totalorder %s38, 3
      %p190 = por %p188, %p189
      %p192 = scmp.ne.s32.totalorder %s177, %s191
      %p193 = scmp.eq.s32.totalorder %s38, 0
      %p194 = por %p192, %p193
      %s196 = sadd.s32 %s195, 1
      %p199 = scmp.eq.s32.totalorder %s32, 3
      %p200 = scmp.ne.s32.totalorder %s195, %s197
      %p201 = scmp.eq.s32.totalorder %s32, 0
      %p202 = por %p200, %p201
      %p203 = scmp.ne.s32.totalorder %s195, %s197
      %p204 = scmp.eq.s32.totalorder %s37, 3
      %p205 = por %p203, %p204
      %p206 = scmp.ne.s32.totalorder %s197, %s198
      %p207 = scmp.eq.s32.totalorder %s37, 0
      %p208 = por %p206, %p207
      %p209 = scmp.ne.s32.totalorder %s197, %s198
      %p210 = scmp.eq.s32.totalorder %s38, 3
      %p211 = por %p209, %p210
      %p213 = scmp.ne.s32.totalorder %s198, %s212
      %p214 = scmp.eq.s32.totalorder %s38, 0
      %p215 = por %p213, %p214
      %s217 = sadd.s32 %s216, 1
      %p220 = scmp.eq.s32.totalorder %s32, 3
      %p221 = scmp.ne.s32.totalorder %s216, %s218
      %p222 = scmp.eq.s32.totalorder %s32, 0
      %p223 = por %p221, %p222
      %p224 = scmp.ne.s32.totalorder %s216, %s218
      %p225 = scmp.eq.s32.totalorder %s37, 3
      %p226 = por %p224, %p225
      %p227 = scmp.ne.s32.totalorder %s218, %s219
      %p228 = scmp.eq.s32.totalorder %s37, 0
      %p229 = por %p227, %p228
      %p230 = scmp.ne.s32.totalorder %s218, %s219
      %p231 = scmp.eq.s32.totalorder %s38, 3
      %p232 = por %p230, %p231
      %p234 = scmp.ne.s32.totalorder %s219, %s233
      %p235 = scmp.eq.s32.totalorder %s38, 0
      %p236 = por %p234, %p235
      %s238 = sadd.s32 %s237, 1
      %p241 = scmp.eq.s32.totalorder %s32, 3
      %p242 = scmp.ne.s32.totalorder %s237, %s239
      %p243 = scmp.eq.s32.totalorder %s32, 0
      %p244 = por %p242, %p243
      %p245 = scmp.ne.s32.totalorder %s237, %s239
      %p246 = scmp.eq.s32.totalorder %s37, 3
      %p247 = por %p245, %p246
      %p248 = scmp.ne.s32.totalorder %s239, %s240
      %p249 = scmp.eq.s32.totalorder %s37, 0
      %p250 = por %p248, %p249
      %p251 = scmp.ne.s32.totalorder %s239, %s240
      %p252 = scmp.eq.s32.totalorder %s38, 3
      %p253 = por %p251, %p252
      %p255 = scmp.ne.s32.totalorder %s240, %s254
      %p256 = scmp.eq.s32.totalorder %s38, 0
      %p257 = por %p255, %p256
      %s259 = sadd.s32 %s258, 1
      %p262 = scmp.eq.s32.totalorder %s32, 3
      %p263 = scmp.ne.s32.totalorder %s258, %s260
      %p264 = scmp.eq.s32.totalorder %s32, 0
      %p265 = por %p263, %p264
      %p266 = scmp.ne.s32.totalorder %s258, %s260
      %p267 = scmp.eq.s32.totalorder %s37, 3
      %p268 = por %p266, %p267
      %p269 = scmp.ne.s32.totalorder %s260, %s261
      %p270 = scmp.eq.s32.totalorder %s37, 0
      %p271 = por %p269, %p270
      %p272 = scmp.ne.s32.totalorder %s260, %s261
      %p273 = scmp.eq.s32.totalorder %s38, 3
      %p274 = por %p272, %p273
      %p276 = scmp.ne.s32.totalorder %s261, %s275
      %p277 = scmp.eq.s32.totalorder %s38, 0
      %p278 = por %p276, %p277
      %s280 = sadd.s32 %s279, 1
      %p283 = scmp.eq.s32.totalorder %s32, 3
      %p284 = scmp.ne.s32.totalorder %s279, %s281
      %p285 = scmp.eq.s32.totalorder %s32, 0
      %p286 = por %p284, %p285
      %p287 = scmp.ne.s32.totalorder %s279, %s281
      %p288 = scmp.eq.s32.totalorder %s37, 3
      %p289 = por %p287, %p288
      %p290 = scmp.ne.s32.totalorder %s281, %s282
      %p291 = scmp.eq.s32.totalorder %s37, 0
      %p292 = por %p290, %p291
      %p293 = scmp.ne.s32.totalorder %s281, %s282
      %p294 = scmp.eq.s32.totalorder %s38, 3
      %p295 = por %p293, %p294
      %p297 = scmp.ne.s32.totalorder %s282, %s296
      %p298 = scmp.eq.s32.totalorder %s38, 0
      %p299 = por %p297, %p298
      %s301 = sadd.s32 %s300, 1
      %p304 = scmp.eq.s32.totalorder %s32, 3
      %p305 = scmp.ne.s32.totalorder %s300, %s302
      %p306 = scmp.eq.s32.totalorder %s32, 0
      %p307 = por %p305, %p306
      %p308 = scmp.ne.s32.totalorder %s300, %s302
      %p309 = scmp.eq.s32.totalorder %s37, 3
      %p310 = por %p308, %p309
      %p311 = scmp.ne.s32.totalorder %s302, %s303
      %p312 = scmp.eq.s32.totalorder %s37, 0
      %p313 = por %p311, %p312
      %p314 = scmp.ne.s32.totalorder %s302, %s303
      %p315 = scmp.eq.s32.totalorder %s38, 3
      %p316 = por %p314, %p315
      %p318 = scmp.ne.s32.totalorder %s303, %s317
      %p319 = scmp.eq.s32.totalorder %s38, 0
      %p320 = por %p318, %p319
      %s322 = sadd.s32 %s321, 1
      %p325 = scmp.eq.s32.totalorder %s32, 3
      %p326 = scmp.ne.s32.totalorder %s321, %s323
      %p327 = scmp.eq.s32.totalorder %s32, 0
      %p328 = por %p326, %p327
      %p329 = scmp.ne.s32.totalorder %s321, %s323
      %p330 = scmp.eq.s32.totalorder %s37, 3
      %p331 = por %p329, %p330
      %p332 = scmp.ne.s32.totalorder %s323, %s324
      %p333 = scmp.eq.s32.totalorder %s37, 0
      %p334 = por %p332, %p333
      %p335 = scmp.ne.s32.totalorder %s323, %s324
      %p336 = scmp.eq.s32.totalorder %s38, 3
      %p337 = por %p335, %p336
      %p339 = scmp.ne.s32.totalorder %s324, %s338
      %p340 = scmp.eq.s32.totalorder %s38, 0
      %p341 = por %p339, %p340
      %s342 = ssub.s32 %s39, %s51
      %s343 = ssub.s32 %s40, %s47
      %s344 = sor.u32 %s342, %s343
      %p345 = scmp.eq.s32.totalorder %s344, 0
      %s347 = sadd.s32 %s346, 1
      %s348 = scalar_select %p345, %s346, %s347
      %p351 = pneg %p345
      %p352 = scmp.eq.s32.totalorder %s32, 3
      %p353 = por %p351, %p352
      %p354 = scmp.ne.s32.totalorder %s346, %s349
      %p355 = scmp.eq.s32.totalorder %s32, 0
      %p356 = por %p354, %p355
      %p357 = scmp.ne.s32.totalorder %s346, %s349
      %p358 = scmp.eq.s32.totalorder %s37, 3
      %p359 = por %p357, %p358
      %p360 = scmp.ne.s32.totalorder %s349, %s350
      %p361 = scmp.eq.s32.totalorder %s37, 0
      %p362 = por %p360, %p361
      %p363 = scmp.ne.s32.totalorder %s349, %s350
      %p364 = scmp.eq.s32.totalorder %s38, 3
      %p365 = por %p363, %p364
      %p367 = scmp.ne.s32.totalorder %s350, %s366
      %p368 = scmp.eq.s32.totalorder %s38, 0
      %p369 = por %p367, %p368
      %p370 = scmp.le.s32.totalorder 1, %s32
      %p371 = scmp.lt.s32.totalorder %s32, 5
      %p372 = pnand %p370, %p371
      %p373 = pneg %p372
      // Predicated region
      $region9: #{tpu_custom_call.1} parent=5 // pred_check
        _
      $region10: #{tpu_custom_call.1} parent=5 // pred_check_branch
        %375 = sbr.rel (%p372) target = $region12
      $region11: #{tpu_custom_call.1} parent=5 // pred_region
        %s376 = ssub.s32 %s32, 1
        // Predicated region
        $region13: #{tpu_custom_call.1} parent=11 // pred_check
          %p377 = pneg %p65
        $region14: #{tpu_custom_call.1} parent=11 // pred_check_branch
          %379 = sbr.rel (%p377) target = $region16
        $region15: #{tpu_custom_call.1} parent=11 // pred_region
          %381 = vsyncadd [#allocation7], 0
          %s383 = sshll.u32 %s0, 4
          %s384 = int_to_ptr.hbm [resolvable:$true] %s383
          %386 = dma.hbm_to_smem %s384, 16, [#allocation4], [#allocation7]
        $region16: #{tpu_custom_call.1} parent=11 // pred_fallthru
          _
        // Predicated region
        $region17: #{tpu_custom_call.1} parent=11 // pred_check
          %p387 = pneg %p86
        $region18: #{tpu_custom_call.1} parent=11 // pred_check_branch
          %389 = sbr.rel (%p387) target = $region20
        $region19: #{tpu_custom_call.1} parent=11 // pred_region
          %391 = vsyncadd [#allocation9], 0
          %s393 = sshll.u32 %s1, 4
          %s394 = int_to_ptr.hbm [resolvable:$true] %s393
          %396 = dma.hbm_to_smem %s394, 16, [#allocation8], [#allocation9]
        $region20: #{tpu_custom_call.1} parent=11 // pred_fallthru
          _
        // Predicated region
        $region21: #{tpu_custom_call.1} parent=11 // pred_check
          %p397 = pneg %p187
        $region22: #{tpu_custom_call.1} parent=11 // pred_check_branch
          %399 = sbr.rel (%p397) target = $region24
        $region23: #{tpu_custom_call.1} parent=11 // pred_region
          %401 = vsyncadd [#allocation15], 0
          %s402 = sshll.u32 %s5, 4
          %s403 = int_to_ptr.hbm [resolvable:$true] %s402
          %s404 = sshll.u32 [#allocation14], 4
          %s405 = int_to_ptr.vmem [resolvable:$true] %s404
          %410 = dma.hbm_to_vmem [thread:$0]  %s403, 512, %s405, [#allocation15], 128, 128, 8
        $region24: #{tpu_custom_call.1} parent=11 // pred_fallthru
          _
        // Predicated region
        $region25: #{tpu_custom_call.1} parent=11 // pred_check
          %p411 = pneg %p208
        $region26: #{tpu_custom_call.1} parent=11 // pred_check_branch
          %413 = sbr.rel (%p411) target = $region28
        $region27: #{tpu_custom_call.1} parent=11 // pred_region
          _
        $region28: #{tpu_custom_call.1} parent=11 // pred_fallthru
          _
        // Predicated region
        $region29: #{tpu_custom_call.1} parent=11 // pred_check
          %p414 = pneg %p229
        $region30: #{tpu_custom_call.1} parent=11 // pred_check_branch
          %416 = sbr.rel (%p414) target = $region32
        $region31: #{tpu_custom_call.1} parent=11 // pred_region
          %418 = vsyncadd [#allocation15], 0
          %s419 = sshll.u32 %s7, 4
          %s420 = int_to_ptr.hbm [resolvable:$true] %s419
          %s421 = sshll.u32 [#allocation16], 4
          %s422 = int_to_ptr.vmem [resolvable:$true] %s421
          %427 = dma.hbm_to_vmem [thread:$0]  %s420, 512, %s422, [#allocation15], 128, 128, 8
        $region32: #{tpu_custom_call.1} parent=11 // pred_fallthru
          _
        // Predicated region
        $region33: #{tpu_custom_call.1} parent=11 // pred_check
          %p428 = pneg %p250
        $region34: #{tpu_custom_call.1} parent=11 // pred_check_branch
          %430 = sbr.rel (%p428) target = $region36
        $region35: #{tpu_custom_call.1} parent=11 // pred_region
          _
        $region36: #{tpu_custom_call.1} parent=11 // pred_fallthru
          _
        // Predicated region
        $region37: #{tpu_custom_call.1} parent=11 // pred_check
          %p431 = pneg %p271
        $region38: #{tpu_custom_call.1} parent=11 // pred_check_branch
          %433 = sbr.rel (%p431) target = $region40
        $region39: #{tpu_custom_call.1} parent=11 // pred_region
          %435 = vsyncadd [#allocation18], 0
          %s436 = sshll.u32 %s9, 4
          %s437 = int_to_ptr.hbm [resolvable:$true] %s436
          %s438 = sshll.u32 [#allocation17], 4
          %s439 = int_to_ptr.vmem [resolvable:$true] %s438
          %444 = dma.hbm_to_vmem [thread:$0]  %s437, 512, %s439, [#allocation18], 128, 128, 8
        $region40: #{tpu_custom_call.1} parent=11 // pred_fallthru
          _
        // Predicated region
        $region41: #{tpu_custom_call.1} parent=11 // pred_check
          %p445 = pneg %p292
        $region42: #{tpu_custom_call.1} parent=11 // pred_check_branch
          %447 = sbr.rel (%p445) target = $region44
        $region43: #{tpu_custom_call.1} parent=11 // pred_region
          _
        $region44: #{tpu_custom_call.1} parent=11 // pred_fallthru
          _
        // Predicated region
        $region45: #{tpu_custom_call.1} parent=11 // pred_check
          %p448 = pneg %p313
        $region46: #{tpu_custom_call.1} parent=11 // pred_check_branch
          %450 = sbr.rel (%p448) target = $region48
        $region47: #{tpu_custom_call.1} parent=11 // pred_region
          %452 = vsyncadd [#allocation18], 0
          %s453 = sshll.u32 %s11, 4
          %s454 = int_to_ptr.hbm [resolvable:$true] %s453
          %s455 = sshll.u32 [#allocation19], 4
          %s456 = int_to_ptr.vmem [resolvable:$true] %s455
          %461 = dma.hbm_to_vmem [thread:$0]  %s454, 512, %s456, [#allocation18], 128, 128, 8
        $region48: #{tpu_custom_call.1} parent=11 // pred_fallthru
          _
        // Predicated region
        $region49: #{tpu_custom_call.1} parent=11 // pred_check
          %p462 = pneg %p334
        $region50: #{tpu_custom_call.1} parent=11 // pred_check_branch
          %464 = sbr.rel (%p462) target = $region52
        $region51: #{tpu_custom_call.1} parent=11 // pred_region
          _
        $region52: #{tpu_custom_call.1} parent=11 // pred_fallthru
          _
      $region12: #{tpu_custom_call.1} parent=5 // pred_fallthru
        _
      %p465 = scmp.lt.s32.totalorder %s32, 4
      // Predicated region
      $region53: #{tpu_custom_call.1} parent=5 // pred_check
        %p466 = pneg %p465
      $region54: #{tpu_custom_call.1} parent=5 // pred_check_branch
        %468 = sbr.rel (%p466) target = $region56
      $region55: #{tpu_custom_call.1} parent=5 // pred_region
        // Predicated region
        $region57: #{tpu_custom_call.1} parent=55 // pred_check
          %p469 = pneg %p106
        $region58: #{tpu_custom_call.1} parent=55 // pred_check_branch
          %471 = sbr.rel (%p469) target = $region60
        $region59: #{tpu_custom_call.1} parent=55 // pred_region
          %s472 = sand.u32 %s96, 1
          %s473 = scalar_lea.sflag [#allocation5], %s472
          %s474 = sand.u32 %s96, 1
          %s475 = smul.addr %s474, 16
          %s476 = scalar_lea.vmem [#allocation10], %s475
          %478 = vsyncadd %s473, 0
          %s479 = smul.addr %s39, 2
          %s480 = smul.addr %s479, 8
          %s481 = scalar_lea.hbm %s2, %s480
          %s482 = sshll.u32 %s481, 4
          %s483 = int_to_ptr.hbm [resolvable:$true] %s482
          %s484 = sshll.u32 %s476, 4
          %s485 = int_to_ptr.vmem [resolvable:$true] %s484
          %490 = dma.hbm_to_vmem [thread:$0]  %s483, 256, %s485, %s473, 128, 128, 8
        $region60: #{tpu_custom_call.1} parent=55 // pred_fallthru
          _
        // Predicated region
        $region61: #{tpu_custom_call.1} parent=55 // pred_check
          %p491 = pneg %p132
        $region62: #{tpu_custom_call.1} parent=55 // pred_check_branch
          %493 = sbr.rel (%p491) target = $region64
        $region63: #{tpu_custom_call.1} parent=55 // pred_region
          %s494 = sand.u32 %s32, 1
          %s495 = scalar_lea.sflag [#allocation12], %s494
          %s496 = sand.u32 %s122, 1
          %s497 = smul.addr %s496, 16
          %s498 = scalar_lea.vmem [#allocation11], %s497
          %500 = vsyncadd %s495, 0
          %s501 = smul.addr %s39, 2
          %s502 = smul.addr %s501, 8
          %s503 = scalar_lea.hbm %s3, %s502
          %s504 = sshll.u32 %s503, 4
          %s505 = int_to_ptr.hbm [resolvable:$true] %s504
          %s506 = sshll.u32 %s498, 4
          %s507 = int_to_ptr.vmem [resolvable:$true] %s506
          %512 = dma.hbm_to_vmem [thread:$0]  %s505, 256, %s507, %s495, 128, 128, 8
        $region64: #{tpu_custom_call.1} parent=55 // pred_fallthru
          _
        // Predicated region
        $region65: #{tpu_custom_call.1} parent=55 // pred_check
          %p513 = pneg %p160
        $region66: #{tpu_custom_call.1} parent=55 // pred_check_branch
          %515 = sbr.rel (%p513) target = $region68
        $region67: #{tpu_custom_call.1} parent=55 // pred_region
          %s516 = sand.u32 %s32, 1
          %s517 = scalar_lea.sflag [#allocation12], %s516
          %s518 = sand.u32 %s150, 1
          %s519 = smul.addr %s518, 8
          %s520 = scalar_lea.vmem [#allocation13], %s519
          %522 = vsyncadd %s517, 0
          %s523 = smul.addr %s39, 2
          %s524 = sadd.s32 %s40, %s523
          %s525 = smul.addr %s524, 8
          %s526 = scalar_lea.hbm %s4, %s525
          %s528 = sshll.u32 %s526, 4
          %s529 = int_to_ptr.hbm [resolvable:$true] %s528
          %s530 = sshll.u32 %s520, 4
          %s531 = int_to_ptr.vmem [resolvable:$true] %s530
          %533 = dma.hbm_to_vmem [thread:$0]  %s529, 128, %s531, %s517
        $region68: #{tpu_custom_call.1} parent=55 // pred_fallthru
          _
      $region56: #{tpu_custom_call.1} parent=5 // pred_fallthru
        _
      %p534 = scmp.le.s32.totalorder 1, %s32
      %p535 = scmp.lt.s32.totalorder %s32, 5
      %p536 = pnand %p534, %p535
      %p537 = pneg %p536
      // Predicated region
      $region69: #{tpu_custom_call.1} parent=5 // pred_check
        _
      $region70: #{tpu_custom_call.1} parent=5 // pred_check_branch
        %539 = sbr.rel (%p536) target = $region72
      $region71: #{tpu_custom_call.1} parent=5 // pred_region
        %s540 = ssub.s32 %s32, 1
        // Predicated region
        $region73: #{tpu_custom_call.1} parent=71 // pred_check
          %p541 = pneg %p65
        $region74: #{tpu_custom_call.1} parent=71 // pred_check_branch
          %543 = sbr.rel (%p541) target = $region76
        $region75: #{tpu_custom_call.1} parent=71 // pred_region
          %545 = dma.done [#allocation7], 16
        $region76: #{tpu_custom_call.1} parent=71 // pred_fallthru
          _
        // Predicated region
        $region77: #{tpu_custom_call.1} parent=71 // pred_check
          %p546 = pneg %p86
        $region78: #{tpu_custom_call.1} parent=71 // pred_check_branch
          %548 = sbr.rel (%p546) target = $region80
        $region79: #{tpu_custom_call.1} parent=71 // pred_region
          %550 = dma.done [#allocation9], 16
        $region80: #{tpu_custom_call.1} parent=71 // pred_fallthru
          _
        %s551 = sand.u32 %s99, 1
        %s552 = scalar_lea.sflag [#allocation5], %s551
        %s553 = sand.u32 %s99, 1
        %s554 = smul.addr %s553, 16
        %s555 = scalar_lea.vmem [#allocation10], %s554
        // Predicated region
        $region81: #{tpu_custom_call.1} parent=71 // pred_check
          %p556 = pneg %p112
        $region82: #{tpu_custom_call.1} parent=71 // pred_check_branch
          %558 = sbr.rel (%p556) target = $region84
        $region83: #{tpu_custom_call.1} parent=71 // pred_region
          %560 = dma.done %s552, 256
        $region84: #{tpu_custom_call.1} parent=71 // pred_fallthru
          _
        %s561 = sand.u32 %s37, 1
        %s562 = scalar_lea.sflag [#allocation12], %s561
        %s563 = sand.u32 %s125, 1
        %s564 = smul.addr %s563, 16
        %s565 = scalar_lea.vmem [#allocation11], %s564
        // Predicated region
        $region85: #{tpu_custom_call.1} parent=71 // pred_check
          %p566 = pneg %p138
        $region86: #{tpu_custom_call.1} parent=71 // pred_check_branch
          %568 = sbr.rel (%p566) target = $region88
        $region87: #{tpu_custom_call.1} parent=71 // pred_region
          %570 = dma.done %s562, 256
        $region88: #{tpu_custom_call.1} parent=71 // pred_fallthru
          _
        %s571 = sand.u32 %s37, 1
        %s572 = scalar_lea.sflag [#allocation12], %s571
        %s573 = sand.u32 %s153, 1
        %s574 = smul.addr %s573, 8
        %s575 = scalar_lea.vmem [#allocation13], %s574
        // Predicated region
        $region89: #{tpu_custom_call.1} parent=71 // pred_check
          %p576 = pneg %p166
        $region90: #{tpu_custom_call.1} parent=71 // pred_check_branch
          %578 = sbr.rel (%p576) target = $region92
        $region91: #{tpu_custom_call.1} parent=71 // pred_region
          %580 = dma.done %s572, 128
        $region92: #{tpu_custom_call.1} parent=71 // pred_fallthru
          _
        // Predicated region
        $region93: #{tpu_custom_call.1} parent=71 // pred_check
          %p581 = pneg %p187
        $region94: #{tpu_custom_call.1} parent=71 // pred_check_branch
          %583 = sbr.rel (%p581) target = $region96
        $region95: #{tpu_custom_call.1} parent=71 // pred_region
          %585 = dma.done [#allocation15], 512
        $region96: #{tpu_custom_call.1} parent=71 // pred_fallthru
          _
        // Predicated region
        $region97: #{tpu_custom_call.1} parent=71 // pred_check
          %p586 = pneg %p229
        $region98: #{tpu_custom_call.1} parent=71 // pred_check_branch
          %588 = sbr.rel (%p586) target = $region100
        $region99: #{tpu_custom_call.1} parent=71 // pred_region
          %590 = dma.done [#allocation15], 512
        $region100: #{tpu_custom_call.1} parent=71 // pred_fallthru
          _
        // Predicated region
        $region101: #{tpu_custom_call.1} parent=71 // pred_check
          %p591 = pneg %p271
        $region102: #{tpu_custom_call.1} parent=71 // pred_check_branch
          %593 = sbr.rel (%p591) target = $region104
        $region103: #{tpu_custom_call.1} parent=71 // pred_region
          %595 = dma.done [#allocation18], 512
        $region104: #{tpu_custom_call.1} parent=71 // pred_fallthru
          _
        // Predicated region
        $region105: #{tpu_custom_call.1} parent=71 // pred_check
          %p596 = pneg %p313
        $region106: #{tpu_custom_call.1} parent=71 // pred_check_branch
          %598 = sbr.rel (%p596) target = $region108
        $region107: #{tpu_custom_call.1} parent=71 // pred_region
          %600 = dma.done [#allocation18], 512
        $region108: #{tpu_custom_call.1} parent=71 // pred_fallthru
          _
        %601 = sfence
        %p602 = pneg %p65
        %p603 = pneg %p62
        %p604 = pneg %p86
        %p605 = pneg %p83
        %s606 = sand.u32 %s99, 1
        %s607 = scalar_lea.sflag [#allocation5], %s606
        %s608 = sand.u32 %s99, 1
        %s609 = smul.addr %s608, 16
        %s610 = scalar_lea.vmem [#allocation10], %s609
        %p611 = pneg %p112
        %p612 = pneg %p109
        %s613 = sand.u32 %s37, 1
        %s614 = scalar_lea.sflag [#allocation12], %s613
        %s615 = sand.u32 %s125, 1
        %s616 = smul.addr %s615, 16
        %s617 = scalar_lea.vmem [#allocation11], %s616
        %p618 = pneg %p138
        %p619 = pneg %p135
        %s620 = sand.u32 %s37, 1
        %s621 = scalar_lea.sflag [#allocation12], %s620
        %s622 = sand.u32 %s153, 1
        %s623 = smul.addr %s622, 8
        %s624 = scalar_lea.vmem [#allocation13], %s623
        %p625 = pneg %p166
        %p626 = pneg %p163
        %p627 = pneg %p187
        %p628 = pneg %p184
        %p629 = pneg %p208
        %p630 = pneg %p205
        %p631 = pneg %p229
        %p632 = pneg %p226
        %p633 = pneg %p250
        %p634 = pneg %p247
        %p635 = pneg %p271
        %p636 = pneg %p268
        %p637 = pneg %p292
        %p638 = pneg %p289
        %p639 = pneg %p313
        %p640 = pneg %p310
        %p641 = pneg %p334
        %p642 = pneg %p331
        %p643 = pneg %p362
        %p644 = pneg %p359
        %s645 = sand.u32 %s349, 1
        %s646 = scalar_lea.sflag [#allocation6], %s645
        %s647 = sand.u32 %s349, 1
        %s648 = smul.addr %s647, 8
        %s649 = scalar_lea.vmem [#allocation20], %s648
        %p650 = scmp.eq.s32.totalorder %s42, 0
        // Predicated region
        $region109: #{tpu_custom_call.1} parent=71 // pred_check
          %p651 = pneg %p650
        $region110: #{tpu_custom_call.1} parent=71 // pred_check_branch
          %653 = sbr.rel (%p651) target = $region112
        $region111: #{tpu_custom_call.1} parent=71 // pred_region
          %v654 = vld [vmem:[%s555] sm:$0xff]
          %v655 = vld [vmem:[%s555 + $0x8] sm:$0xff]
          %v656 = vld [vmem:[#allocation14] sm:$0xff]
          %v657 = vld [vmem:[#allocation14 + $0x8] sm:$0xff]
          %v658 = vld [vmem:[#allocation14 + $0x10] sm:$0xff]
          %v659 = vld [vmem:[#allocation14 + $0x18] sm:$0xff]
          %v660 = vld [vmem:[%s6] sm:$0x1]
          %v662 = vperm.slane %v660, 0
          %vm664 = vcmask 261120
          %v666 = vsel %vm664, %v654, 0
          %v669 = vsel %vm664, %v655, 0
          %671 = vmatpush.msra.mxu0 0.0
          %672 = vmatpush.msra.mxu0 0.0
          %673 = vmatpush.msra.mxu0 0.0
          %674 = vmatpush.msra.mxu0 0.0
          %675 = vmatpush.msra.mxu0 0.0
          %676 = vmatpush.msra.mxu0 0.0
          %677 = vmatpush.msra.mxu0 0.0
          %678 = vmatpush.msra.mxu0 0.0
          %679 = vmatpush.msra.mxu0 0.0
          %680 = vmatpush.msra.mxu0 0.0
          %681 = vmatpush.msra.mxu0 0.0
          %682 = vmatpush.msra.mxu0 0.0
          %683 = vmatpush.msra.mxu0 %v659
          %684 = vmatpush.msra.mxu0 %v658
          %685 = vmatpush.msra.mxu0 %v657
          %686 = vmatpush.msra.mxu0 %v656
          %687 = vmatmul.f32.gmra.mxu0 %v666
          %v688 = vpop.f32.mrf.mxu0
          %v689 = vadd.f32 %v662, %v688
          %690 = vmatmul.f32.gmra.mxu0 %v669
          %v691 = vpop.f32.mrf.mxu0
          %v692 = vadd.f32 %v662, %v691
          %693 = vdwg.mxu0
          %v694 = vld [vmem:[%s565] sm:$0xff]
          %v695 = vld [vmem:[%s565 + $0x8] sm:$0xff]
          %v696 = vld [vmem:[#allocation16] sm:$0xff]
          %v697 = vld [vmem:[#allocation16 + $0x8] sm:$0xff]
          %v698 = vld [vmem:[#allocation16 + $0x10] sm:$0xff]
          %v699 = vld [vmem:[#allocation16 + $0x18] sm:$0xff]
          %v700 = vld [vmem:[%s8] sm:$0x1]
          %v702 = vperm.slane %v700, 0
          %v705 = vsel %vm664, %v694, 0
          %v708 = vsel %vm664, %v695, 0
          %710 = vmatpush.msra.mxu0 0.0
          %711 = vmatpush.msra.mxu0 0.0
          %712 = vmatpush.msra.mxu0 0.0
          %713 = vmatpush.msra.mxu0 0.0
          %714 = vmatpush.msra.mxu0 0.0
          %715 = vmatpush.msra.mxu0 0.0
          %716 = vmatpush.msra.mxu0 0.0
          %717 = vmatpush.msra.mxu0 0.0
          %718 = vmatpush.msra.mxu0 0.0
          %719 = vmatpush.msra.mxu0 0.0
          %720 = vmatpush.msra.mxu0 0.0
          %721 = vmatpush.msra.mxu0 0.0
          %722 = vmatpush.msra.mxu0 %v699
          %723 = vmatpush.msra.mxu0 %v698
          %724 = vmatpush.msra.mxu0 %v697
          %725 = vmatpush.msra.mxu0 %v696
          %726 = vmatmul.f32.gmra.mxu0 %v705
          %v727 = vpop.f32.mrf.mxu0
          %v728 = vadd.f32 %v702, %v727
          %729 = vmatmul.f32.gmra.mxu0 %v708
          %v730 = vpop.f32.mrf.mxu0
          %v731 = vadd.f32 %v702, %v730
          %732 = vdwg.mxu0
          %733 = vst.msk [vmem:[#allocation2] sm:$0xff] %vm664, %v689
          %734 = vst.msk [vmem:[#allocation2 + $0x8] sm:$0xff] %vm664, %v692
          %735 = vst.msk [vmem:[#allocation3] sm:$0xff] %vm664, %v728
          %736 = vst.msk [vmem:[#allocation3 + $0x8] sm:$0xff] %vm664, %v731
        $region112: #{tpu_custom_call.1} parent=71 // pred_fallthru
          _
        %s737 = sld [smem:[#allocation4 + %s41]]
        %s738 = sld [smem:[#allocation8 + %s41]]
        %v739 = vld [vmem:[%s575] sm:$0xff]
        %v740 = vld [vmem:[#allocation17] sm:$0xff]
        %v741 = vld [vmem:[#allocation17 + $0x8] sm:$0xff]
        %v742 = vld [vmem:[#allocation17 + $0x10] sm:$0xff]
        %v743 = vld [vmem:[#allocation17 + $0x18] sm:$0xff]
        %v744 = vld [vmem:[%s10] sm:$0x1]
        %v746 = vperm.slane %v744, 0
        %vm748 = vcmask 261120
        %v750 = vsel %vm748, %v739, 0
        %752 = vmatpush.msra.mxu0 0.0
        %753 = vmatpush.msra.mxu0 0.0
        %754 = vmatpush.msra.mxu0 0.0
        %755 = vmatpush.msra.mxu0 0.0
        %756 = vmatpush.msra.mxu0 0.0
        %757 = vmatpush.msra.mxu0 0.0
        %758 = vmatpush.msra.mxu0 0.0
        %759 = vmatpush.msra.mxu0 0.0
        %760 = vmatpush.msra.mxu0 0.0
        %761 = vmatpush.msra.mxu0 0.0
        %762 = vmatpush.msra.mxu0 0.0
        %763 = vmatpush.msra.mxu0 0.0
        %764 = vmatpush.msra.mxu0 %v743
        %765 = vmatpush.msra.mxu0 %v742
        %766 = vmatpush.msra.mxu0 %v741
        %767 = vmatpush.msra.mxu0 %v740
        %768 = vmatmul.f32.gmra.mxu0 %v750
        %v769 = vpop.f32.mrf.mxu0
        %v770 = vadd.f32 %v746, %v769
        %771 = vdwg.mxu0
        %v772 = vmul.f32 %v770, 0.35355338
        %v773 = vlaneseq
        %v774 = vshrl.u32 %v773, 7
        %s775 = smul.u32 %s42, 8
        %v776 = vstv %s775
        %v777 = vadd.s32 %v774, %v776
        %v778 = vcvt.s32.f32 %v777
        %v779 = vadd.f32 %v770, %v778
        %v780 = vstv %s738
        %v781 = vmul.f32 %v779, %v780
        %v782 = vfloor.f32 %v781
        %v783 = vstv %s737
        %v784 = vmul.f32 %v782, %v783
        %v785 = vsub.f32 %v779, %v784
        %v786 = vmul.f32 %v785, 1.0666667
        %v787 = vsub.f32 %v786, 0.5
        %v788 = vfloor.f32 %v787
        %v789 = vadd.f32 %v788, 1.0
        %v790 = vsub.f32 %v787, %v788
        %v791 = vmul.f32 %v790, 0.5
        %v792 = vsub.f32 0.5, %v791
        %v793 = vlaneseq
        %v794 = vand.u32 %v793, 127
        %v795 = vcvt.s32.f32 %v794
        %v796 = vld [vmem:[#allocation2] sm:$0xff]
        %v797 = vld [vmem:[#allocation2 + $0x8] sm:$0xff]
        %v798 = vld [vmem:[#allocation3] sm:$0xff]
        %v799 = vld [vmem:[#allocation3 + $0x8] sm:$0xff]
        %vm800 = vcmask 64512
        %v802 = vsel %vm800, %v772, 0
        %v805 = vsel %vm800, %v796, 0
        %v808 = vsel %vm800, %v797, 0
        %810 = vmatpush.xpose.msra.mxu0 0.0
        %811 = vmatpush.xpose.msra.mxu0 0.0
        %812 = vmatpush.xpose.msra.mxu0 0.0
        %813 = vmatpush.xpose.msra.mxu0 0.0
        %814 = vmatpush.xpose.msra.mxu0 0.0
        %815 = vmatpush.xpose.msra.mxu0 0.0
        %816 = vmatpush.xpose.msra.mxu0 0.0
        %817 = vmatpush.xpose.msra.mxu0 0.0
        %818 = vmatpush.xpose.msra.mxu0 0.0
        %819 = vmatpush.xpose.msra.mxu0 0.0
        %820 = vmatpush.xpose.msra.mxu0 0.0
        %821 = vmatpush.xpose.msra.mxu0 0.0
        %822 = vmatpush.xpose.msra.mxu0 0.0
        %823 = vmatpush.xpose.msra.mxu0 0.0
        %824 = vmatpush.xpose.msra.mxu0 %v808
        %825 = vmatpush.xpose.msra.mxu0 %v805
        %826 = vmatmul.f32.gmra.mxu0 %v802
        %v827 = vpop.f32.mrf.mxu0
        %v828 = vadd.f32 0.0, %v827
        %829 = vdwg.mxu0
        %831 = vset.pattern.permute.xlu0 32
        %832 = vperm.xlu0 %831, %v788
        %v833 = vpop.permute.xlu0 %832
        %vm835 = vcmp.eq.f32.partialorder %v795, %v833
        %v836 = vsel %vm835, 1, 0
        %v837 = vcvt.s32.f32 %v836
        %839 = vset.pattern.permute.xlu0 32
        %840 = vperm.xlu0 %839, %v792
        %v841 = vpop.permute.xlu0 %840
        %v843 = vmul.f32 %v841, %v837
        %845 = vset.pattern.permute.xlu0 32
        %846 = vperm.xlu0 %845, %v789
        %v847 = vpop.permute.xlu0 %846
        %vm849 = vcmp.eq.f32.partialorder %v795, %v847
        %v850 = vsel %vm849, 1, 0
        %v851 = vcvt.s32.f32 %v850
        %853 = vset.pattern.permute.xlu0 32
        %854 = vperm.xlu0 %853, %v791
        %v855 = vpop.permute.xlu0 %854
        %v857 = vmul.f32 %v855, %v851
        %v858 = vadd.f32 %v843, %v857
        %v859 = vmul.f32 %v858, %v828
        %vm860 = vcmask 130048
        %v861 = vsel %vm860, %v859, 0.0
        %862 = vadd.xlane.f32.xlu0 %v861
        %v863 = vpop.xlane.xlu0 %862
        %864 = vset.pattern.permute.xlu0 33
        %865 = vperm.xlu0 %864, %v788
        %v866 = vpop.permute.xlu0 %865
        %vm868 = vcmp.eq.f32.partialorder %v795, %v866
        %v869 = vsel %vm868, 1, 0
        %v870 = vcvt.s32.f32 %v869
        %871 = vset.pattern.permute.xlu0 33
        %872 = vperm.xlu0 %871, %v792
        %v873 = vpop.permute.xlu0 %872
        %v875 = vmul.f32 %v873, %v870
        %876 = vset.pattern.permute.xlu0 33
        %877 = vperm.xlu0 %876, %v789
        %v878 = vpop.permute.xlu0 %877
        %vm880 = vcmp.eq.f32.partialorder %v795, %v878
        %v881 = vsel %vm880, 1, 0
        %v882 = vcvt.s32.f32 %v881
        %883 = vset.pattern.permute.xlu0 33
        %884 = vperm.xlu0 %883, %v791
        %v885 = vpop.permute.xlu0 %884
        %v887 = vmul.f32 %v885, %v882
        %v888 = vadd.f32 %v875, %v887
        %v889 = vmul.f32 %v888, %v828
        %v890 = vsel %vm860, %v889, 0.0
        %891 = vadd.xlane.f32.xlu0 %v890
        %v892 = vpop.xlane.xlu0 %891
        %893 = vset.pattern.permute.xlu0 34
        %894 = vperm.xlu0 %893, %v788
        %v895 = vpop.permute.xlu0 %894
        %vm897 = vcmp.eq.f32.partialorder %v795, %v895
        %v898 = vsel %vm897, 1, 0
        %v899 = vcvt.s32.f32 %v898
        %900 = vset.pattern.permute.xlu0 34
        %901 = vperm.xlu0 %900, %v792
        %v902 = vpop.permute.xlu0 %901
        %v904 = vmul.f32 %v902, %v899
        %905 = vset.pattern.permute.xlu0 34
        %906 = vperm.xlu0 %905, %v789
        %v907 = vpop.permute.xlu0 %906
        %vm909 = vcmp.eq.f32.partialorder %v795, %v907
        %v910 = vsel %vm909, 1, 0
        %v911 = vcvt.s32.f32 %v910
        %912 = vset.pattern.permute.xlu0 34
        %913 = vperm.xlu0 %912, %v791
        %v914 = vpop.permute.xlu0 %913
        %v916 = vmul.f32 %v914, %v911
        %v917 = vadd.f32 %v904, %v916
        %v918 = vmul.f32 %v917, %v828
        %v919 = vsel %vm860, %v918, 0.0
        %920 = vadd.xlane.f32.xlu0 %v919
        %v921 = vpop.xlane.xlu0 %920
        %922 = vset.pattern.permute.xlu0 35
        %923 = vperm.xlu0 %922, %v788
        %v924 = vpop.permute.xlu0 %923
        %vm926 = vcmp.eq.f32.partialorder %v795, %v924
        %v927 = vsel %vm926, 1, 0
        %v928 = vcvt.s32.f32 %v927
        %929 = vset.pattern.permute.xlu0 35
        %930 = vperm.xlu0 %929, %v792
        %v931 = vpop.permute.xlu0 %930
        %v933 = vmul.f32 %v931, %v928
        %934 = vset.pattern.permute.xlu0 35
        %935 = vperm.xlu0 %934, %v789
        %v936 = vpop.permute.xlu0 %935
        %vm938 = vcmp.eq.f32.partialorder %v795, %v936
        %v939 = vsel %vm938, 1, 0
        %v940 = vcvt.s32.f32 %v939
        %941 = vset.pattern.permute.xlu0 35
        %942 = vperm.xlu0 %941, %v791
        %v943 = vpop.permute.xlu0 %942
        %v945 = vmul.f32 %v943, %v940
        %v946 = vadd.f32 %v933, %v945
        %v947 = vmul.f32 %v946, %v828
        %v948 = vsel %vm860, %v947, 0.0
        %949 = vadd.xlane.f32.xlu0 %v948
        %v950 = vpop.xlane.xlu0 %949
        %951 = vset.pattern.permute.xlu0 36
        %952 = vperm.xlu0 %951, %v788
        %v953 = vpop.permute.xlu0 %952
        %vm955 = vcmp.eq.f32.partialorder %v795, %v953
        %v956 = vsel %vm955, 1, 0
        %v957 = vcvt.s32.f32 %v956
        %958 = vset.pattern.permute.xlu0 36
        %959 = vperm.xlu0 %958, %v792
        %v960 = vpop.permute.xlu0 %959
        %v962 = vmul.f32 %v960, %v957
        %963 = vset.pattern.permute.xlu0 36
        %964 = vperm.xlu0 %963, %v789
        %v965 = vpop.permute.xlu0 %964
        %vm967 = vcmp.eq.f32.partialorder %v795, %v965
        %v968 = vsel %vm967, 1, 0
        %v969 = vcvt.s32.f32 %v968
        %970 = vset.pattern.permute.xlu0 36
        %971 = vperm.xlu0 %970, %v791
        %v972 = vpop.permute.xlu0 %971
        %v974 = vmul.f32 %v972, %v969
        %v975 = vadd.f32 %v962, %v974
        %v976 = vmul.f32 %v975, %v828
        %v977 = vsel %vm860, %v976, 0.0
        %978 = vadd.xlane.f32.xlu0 %v977
        %v979 = vpop.xlane.xlu0 %978
        %vm980 = vcmask 7168
        %v981 = vsel %vm980, %v863, %v892
        %vm982 = vcmask 15360
        %v983 = vsel %vm982, %v981, %v921
        %vm984 = vcmask 23552
        %v985 = vsel %vm984, %v983, %v950
        %vm986 = vcmask 31744
        %v987 = vsel %vm986, %v985, %v979
        %vm988 = vcmask 39936
        %v989 = vsel %vm988, %v987, -inf
        %990 = vmax.xlane.f32.xlu0 %v989
        %v991 = vpop.xlane.xlu0 %990
        %v992 = vsub.f32 %v987, %v991
        %v993 = vmul.f32 %v992, 1.442695
        %v994 = vpow.pop %v993
        %v995 = vsel %vm988, %v994, 0.0
        %996 = vadd.xlane.f32.xlu0 %v995
        %v997 = vpop.xlane.xlu0 %996
        %v998 = vrcp.pop %v997
        %v999 = vmul.f32 %v994, %v998
        %1001 = vset.pattern.permute.xlu0 0
        %1002 = vperm.xlu0 %1001, %v999
        %v1003 = vpop.permute.xlu0 %1002
        %v1005 = vmul.f32 %v1003, %v858
        %1006 = vset.pattern.permute.xlu0 1
        %1007 = vperm.xlu0 %1006, %v999
        %v1008 = vpop.permute.xlu0 %1007
        %v1010 = vmul.f32 %v1008, %v888
        %v1011 = vadd.f32 %v1005, %v1010
        %1012 = vset.pattern.permute.xlu0 2
        %1013 = vperm.xlu0 %1012, %v999
        %v1014 = vpop.permute.xlu0 %1013
        %v1016 = vmul.f32 %v1014, %v917
        %v1017 = vadd.f32 %v1011, %v1016
        %1018 = vset.pattern.permute.xlu0 3
        %1019 = vperm.xlu0 %1018, %v999
        %v1020 = vpop.permute.xlu0 %1019
        %v1022 = vmul.f32 %v1020, %v946
        %v1023 = vadd.f32 %v1017, %v1022
        %1024 = vset.pattern.permute.xlu0 4
        %1025 = vperm.xlu0 %1024, %v999
        %v1026 = vpop.permute.xlu0 %1025
        %v1028 = vmul.f32 %v1026, %v975
        %v1029 = vadd.f32 %v1023, %v1028
        %v1031 = vsel %vm860, %v1029, 0
        %1033 = vmatpush.msra.mxu0 0.0
        %1034 = vmatpush.msra.mxu0 0.0
        %1035 = vmatpush.msra.mxu0 0.0
        %1036 = vmatpush.msra.mxu0 0.0
        %1037 = vmatpush.msra.mxu0 0.0
        %1038 = vmatpush.msra.mxu0 0.0
        %1039 = vmatpush.msra.mxu0 0.0
        %1040 = vmatpush.msra.mxu0 0.0
        %1041 = vmatpush.msra.mxu0 0.0
        %1042 = vmatpush.msra.mxu0 0.0
        %1043 = vmatpush.msra.mxu0 0.0
        %1044 = vmatpush.msra.mxu0 0.0
        %1045 = vmatpush.msra.mxu0 0.0
        %1046 = vmatpush.msra.mxu0 0.0
        %1047 = vmatpush.msra.mxu0 %v799
        %1048 = vmatpush.msra.mxu0 %v798
        %1049 = vmatmul.f32.gmra.mxu0 %v1031
        %v1050 = vpop.f32.mrf.mxu0
        %v1051 = vadd.f32 0.0, %v1050
        %1052 = vdwg.mxu0
        %1053 = vrot.lane.b32.xlu0 %v772, 120
        %v1054 = vpop.permute.xlu0 %1053
        %1055 = vrot.lane.b32.xlu0 %v796, 120
        %v1056 = vpop.permute.xlu0 %1055
        %1057 = vrot.lane.b32.xlu0 %v797, 120
        %v1058 = vpop.permute.xlu0 %1057
        %v1059 = vsel %vm800, %v1054, 0
        %v1061 = vsel %vm800, %v1056, 0
        %v1063 = vsel %vm800, %v1058, 0
        %1065 = vmatpush.xpose.msra.mxu0 0.0
        %1066 = vmatpush.xpose.msra.mxu0 0.0
        %1067 = vmatpush.xpose.msra.mxu0 0.0
        %1068 = vmatpush.xpose.msra.mxu0 0.0
        %1069 = vmatpush.xpose.msra.mxu0 0.0
        %1070 = vmatpush.xpose.msra.mxu0 0.0
        %1071 = vmatpush.xpose.msra.mxu0 0.0
        %1072 = vmatpush.xpose.msra.mxu0 0.0
        %1073 = vmatpush.xpose.msra.mxu0 0.0
        %1074 = vmatpush.xpose.msra.mxu0 0.0
        %1075 = vmatpush.xpose.msra.mxu0 0.0
        %1076 = vmatpush.xpose.msra.mxu0 0.0
        %1077 = vmatpush.xpose.msra.mxu0 0.0
        %1078 = vmatpush.xpose.msra.mxu0 0.0
        %1079 = vmatpush.xpose.msra.mxu0 %v1063
        %1080 = vmatpush.xpose.msra.mxu0 %v1061
        %1081 = vmatmul.f32.gmra.mxu0 %v1059
        %v1082 = vpop.f32.mrf.mxu0
        %v1083 = vadd.f32 0.0, %v1082
        %1084 = vdwg.mxu0
        %1085 = vset.pattern.permute.xlu0 37
        %1086 = vperm.xlu0 %1085, %v788
        %v1087 = vpop.permute.xlu0 %1086
        %vm1089 = vcmp.eq.f32.partialorder %v795, %v1087
        %v1090 = vsel %vm1089, 1, 0
        %v1091 = vcvt.s32.f32 %v1090
        %1092 = vset.pattern.permute.xlu0 37
        %1093 = vperm.xlu0 %1092, %v792
        %v1094 = vpop.permute.xlu0 %1093
        %v1096 = vmul.f32 %v1094, %v1091
        %1097 = vset.pattern.permute.xlu0 37
        %1098 = vperm.xlu0 %1097, %v789
        %v1099 = vpop.permute.xlu0 %1098
        %vm1101 = vcmp.eq.f32.partialorder %v795, %v1099
        %v1102 = vsel %vm1101, 1, 0
        %v1103 = vcvt.s32.f32 %v1102
        %1104 = vset.pattern.permute.xlu0 37
        %1105 = vperm.xlu0 %1104, %v791
        %v1106 = vpop.permute.xlu0 %1105
        %v1108 = vmul.f32 %v1106, %v1103
        %v1109 = vadd.f32 %v1096, %v1108
        %v1110 = vmul.f32 %v1109, %v1083
        %v1111 = vsel %vm860, %v1110, 0.0
        %1112 = vadd.xlane.f32.xlu0 %v1111
        %v1113 = vpop.xlane.xlu0 %1112
        %1114 = vset.pattern.permute.xlu0 38
        %1115 = vperm.xlu0 %1114, %v788
        %v1116 = vpop.permute.xlu0 %1115
        %vm1118 = vcmp.eq.f32.partialorder %v795, %v1116
        %v1119 = vsel %vm1118, 1, 0
        %v1120 = vcvt.s32.f32 %v1119
        %1121 = vset.pattern.permute.xlu0 38
        %1122 = vperm.xlu0 %1121, %v792
        %v1123 = vpop.permute.xlu0 %1122
        %v1125 = vmul.f32 %v1123, %v1120
        %1126 = vset.pattern.permute.xlu0 38
        %1127 = vperm.xlu0 %1126, %v789
        %v1128 = vpop.permute.xlu0 %1127
        %vm1130 = vcmp.eq.f32.partialorder %v795, %v1128
        %v1131 = vsel %vm1130, 1, 0
        %v1132 = vcvt.s32.f32 %v1131
        %1133 = vset.pattern.permute.xlu0 38
        %1134 = vperm.xlu0 %1133, %v791
        %v1135 = vpop.permute.xlu0 %1134
        %v1137 = vmul.f32 %v1135, %v1132
        %v1138 = vadd.f32 %v1125, %v1137
        %v1139 = vmul.f32 %v1138, %v1083
        %v1140 = vsel %vm860, %v1139, 0.0
        %1141 = vadd.xlane.f32.xlu0 %v1140
        %v1142 = vpop.xlane.xlu0 %1141
        %1143 = vset.pattern.permute.xlu0 39
        %1144 = vperm.xlu0 %1143, %v788
        %v1145 = vpop.permute.xlu0 %1144
        %vm1147 = vcmp.eq.f32.partialorder %v795, %v1145
        %v1148 = vsel %vm1147, 1, 0
        %v1149 = vcvt.s32.f32 %v1148
        %1150 = vset.pattern.permute.xlu0 39
        %1151 = vperm.xlu0 %1150, %v792
        %v1152 = vpop.permute.xlu0 %1151
        %v1154 = vmul.f32 %v1152, %v1149
        %1155 = vset.pattern.permute.xlu0 39
        %1156 = vperm.xlu0 %1155, %v789
        %v1157 = vpop.permute.xlu0 %1156
        %vm1159 = vcmp.eq.f32.partialorder %v795, %v1157
        %v1160 = vsel %vm1159, 1, 0
        %v1161 = vcvt.s32.f32 %v1160
        %1162 = vset.pattern.permute.xlu0 39
        %1163 = vperm.xlu0 %1162, %v791
        %v1164 = vpop.permute.xlu0 %1163
        %v1166 = vmul.f32 %v1164, %v1161
        %v1167 = vadd.f32 %v1154, %v1166
        %v1168 = vmul.f32 %v1167, %v1083
        %v1169 = vsel %vm860, %v1168, 0.0
        %1170 = vadd.xlane.f32.xlu0 %v1169
        %v1171 = vpop.xlane.xlu0 %1170
        %1172 = vset.pattern.permute.xlu0 40
        %1173 = vperm.xlu0 %1172, %v788
        %v1174 = vpop.permute.xlu0 %1173
        %vm1176 = vcmp.eq.f32.partialorder %v795, %v1174
        %v1177 = vsel %vm1176, 1, 0
        %v1178 = vcvt.s32.f32 %v1177
        %1179 = vset.pattern.permute.xlu0 40
        %1180 = vperm.xlu0 %1179, %v792
        %v1181 = vpop.permute.xlu0 %1180
        %v1183 = vmul.f32 %v1181, %v1178
        %1184 = vset.pattern.permute.xlu0 40
        %1185 = vperm.xlu0 %1184, %v789
        %v1186 = vpop.permute.xlu0 %1185
        %vm1188 = vcmp.eq.f32.partialorder %v795, %v1186
        %v1189 = vsel %vm1188, 1, 0
        %v1190 = vcvt.s32.f32 %v1189
        %1191 = vset.pattern.permute.xlu0 40
        %1192 = vperm.xlu0 %1191, %v791
        %v1193 = vpop.permute.xlu0 %1192
        %v1195 = vmul.f32 %v1193, %v1190
        %v1196 = vadd.f32 %v1183, %v1195
        %v1197 = vmul.f32 %v1196, %v1083
        %v1198 = vsel %vm860, %v1197, 0.0
        %1199 = vadd.xlane.f32.xlu0 %v1198
        %v1200 = vpop.xlane.xlu0 %1199
        %1201 = vset.pattern.permute.xlu0 41
        %1202 = vperm.xlu0 %1201, %v788
        %v1203 = vpop.permute.xlu0 %1202
        %vm1205 = vcmp.eq.f32.partialorder %v795, %v1203
        %v1206 = vsel %vm1205, 1, 0
        %v1207 = vcvt.s32.f32 %v1206
        %1208 = vset.pattern.permute.xlu0 41
        %1209 = vperm.xlu0 %1208, %v792
        %v1210 = vpop.permute.xlu0 %1209
        %v1212 = vmul.f32 %v1210, %v1207
        %1213 = vset.pattern.permute.xlu0 41
        %1214 = vperm.xlu0 %1213, %v789
        %v1215 = vpop.permute.xlu0 %1214
        %vm1217 = vcmp.eq.f32.partialorder %v795, %v1215
        %v1218 = vsel %vm1217, 1, 0
        %v1219 = vcvt.s32.f32 %v1218
        %1220 = vset.pattern.permute.xlu0 41
        %1221 = vperm.xlu0 %1220, %v791
        %v1222 = vpop.permute.xlu0 %1221
        %v1224 = vmul.f32 %v1222, %v1219
        %v1225 = vadd.f32 %v1212, %v1224
        %v1226 = vmul.f32 %v1225, %v1083
        %v1227 = vsel %vm860, %v1226, 0.0
        %1228 = vadd.xlane.f32.xlu0 %v1227
        %v1229 = vpop.xlane.xlu0 %1228
        %v1230 = vsel %vm980, %v1113, %v1142
        %v1231 = vsel %vm982, %v1230, %v1171
        %v1232 = vsel %vm984, %v1231, %v1200
        %v1233 = vsel %vm986, %v1232, %v1229
        %v1234 = vsel %vm988, %v1233, -inf
        %1235 = vmax.xlane.f32.xlu0 %v1234
        %v1236 = vpop.xlane.xlu0 %1235
        %v1237 = vsub.f32 %v1233, %v1236
        %v1238 = vmul.f32 %v1237, 1.442695
        %v1239 = vpow.pop %v1238
        %v1240 = vsel %vm988, %v1239, 0.0
        %1241 = vadd.xlane.f32.xlu0 %v1240
        %v1242 = vpop.xlane.xlu0 %1241
        %v1243 = vrcp.pop %v1242
        %v1244 = vmul.f32 %v1239, %v1243
        %1246 = vset.pattern.permute.xlu0 0
        %1247 = vperm.xlu0 %1246, %v1244
        %v1248 = vpop.permute.xlu0 %1247
        %v1250 = vmul.f32 %v1248, %v1109
        %1251 = vset.pattern.permute.xlu0 1
        %1252 = vperm.xlu0 %1251, %v1244
        %v1253 = vpop.permute.xlu0 %1252
        %v1255 = vmul.f32 %v1253, %v1138
        %v1256 = vadd.f32 %v1250, %v1255
        %1257 = vset.pattern.permute.xlu0 2
        %1258 = vperm.xlu0 %1257, %v1244
        %v1259 = vpop.permute.xlu0 %1258
        %v1261 = vmul.f32 %v1259, %v1167
        %v1262 = vadd.f32 %v1256, %v1261
        %1263 = vset.pattern.permute.xlu0 3
        %1264 = vperm.xlu0 %1263, %v1244
        %v1265 = vpop.permute.xlu0 %1264
        %v1267 = vmul.f32 %v1265, %v1196
        %v1268 = vadd.f32 %v1262, %v1267
        %1269 = vset.pattern.permute.xlu0 4
        %1270 = vperm.xlu0 %1269, %v1244
        %v1271 = vpop.permute.xlu0 %1270
        %v1273 = vmul.f32 %v1271, %v1225
        %v1274 = vadd.f32 %v1268, %v1273
        %1277 = vrot.lane.b32.xlu0 %v798, 120
        %v1278 = vpop.permute.xlu0 %1277
        %1279 = vrot.lane.b32.xlu0 %v799, 120
        %v1280 = vpop.permute.xlu0 %1279
        %v1284 = vsel %vm860, %v1274, 0
        %1286 = vmatpush.msra.mxu0 0.0
        %1287 = vmatpush.msra.mxu0 0.0
        %1288 = vmatpush.msra.mxu0 0.0
        %1289 = vmatpush.msra.mxu0 0.0
        %1290 = vmatpush.msra.mxu0 0.0
        %1291 = vmatpush.msra.mxu0 0.0
        %1292 = vmatpush.msra.mxu0 0.0
        %1293 = vmatpush.msra.mxu0 0.0
        %1294 = vmatpush.msra.mxu0 0.0
        %1295 = vmatpush.msra.mxu0 0.0
        %1296 = vmatpush.msra.mxu0 0.0
        %1297 = vmatpush.msra.mxu0 0.0
        %1298 = vmatpush.msra.mxu0 0.0
        %1299 = vmatpush.msra.mxu0 0.0
        %1300 = vmatpush.msra.mxu0 %v1280
        %1301 = vmatpush.msra.mxu0 %v1278
        %1302 = vmatmul.f32.gmra.mxu0 %v1284
        %v1303 = vpop.f32.mrf.mxu0
        %v1304 = vadd.f32 0.0, %v1303
        %1305 = vdwg.mxu0
        %1306 = vrot.lane.b32.xlu0 %v772, 112
        %v1307 = vpop.permute.xlu0 %1306
        %1308 = vrot.lane.b32.xlu0 %v796, 112
        %v1309 = vpop.permute.xlu0 %1308
        %1310 = vrot.lane.b32.xlu0 %v797, 112
        %v1311 = vpop.permute.xlu0 %1310
        %v1312 = vsel %vm800, %v1307, 0
        %v1314 = vsel %vm800, %v1309, 0
        %v1316 = vsel %vm800, %v1311, 0
        %1318 = vmatpush.xpose.msra.mxu0 0.0
        %1319 = vmatpush.xpose.msra.mxu0 0.0
        %1320 = vmatpush.xpose.msra.mxu0 0.0
        %1321 = vmatpush.xpose.msra.mxu0 0.0
        %1322 = vmatpush.xpose.msra.mxu0 0.0
        %1323 = vmatpush.xpose.msra.mxu0 0.0
        %1324 = vmatpush.xpose.msra.mxu0 0.0
        %1325 = vmatpush.xpose.msra.mxu0 0.0
        %1326 = vmatpush.xpose.msra.mxu0 0.0
        %1327 = vmatpush.xpose.msra.mxu0 0.0
        %1328 = vmatpush.xpose.msra.mxu0 0.0
        %1329 = vmatpush.xpose.msra.mxu0 0.0
        %1330 = vmatpush.xpose.msra.mxu0 0.0
        %1331 = vmatpush.xpose.msra.mxu0 0.0
        %1332 = vmatpush.xpose.msra.mxu0 %v1316
        %1333 = vmatpush.xpose.msra.mxu0 %v1314
        %1334 = vmatmul.f32.gmra.mxu0 %v1312
        %v1335 = vpop.f32.mrf.mxu0
        %v1336 = vadd.f32 0.0, %v1335
        %1337 = vdwg.mxu0
        %1338 = vset.pattern.permute.xlu0 42
        %1339 = vperm.xlu0 %1338, %v788
        %v1340 = vpop.permute.xlu0 %1339
        %vm1342 = vcmp.eq.f32.partialorder %v795, %v1340
        %v1343 = vsel %vm1342, 1, 0
        %v1344 = vcvt.s32.f32 %v1343
        %1345 = vset.pattern.permute.xlu0 42
        %1346 = vperm.xlu0 %1345, %v792
        %v1347 = vpop.permute.xlu0 %1346
        %v1349 = vmul.f32 %v1347, %v1344
        %1350 = vset.pattern.permute.xlu0 42
        %1351 = vperm.xlu0 %1350, %v789
        %v1352 = vpop.permute.xlu0 %1351
        %vm1354 = vcmp.eq.f32.partialorder %v795, %v1352
        %v1355 = vsel %vm1354, 1, 0
        %v1356 = vcvt.s32.f32 %v1355
        %1357 = vset.pattern.permute.xlu0 42
        %1358 = vperm.xlu0 %1357, %v791
        %v1359 = vpop.permute.xlu0 %1358
        %v1361 = vmul.f32 %v1359, %v1356
        %v1362 = vadd.f32 %v1349, %v1361
        %v1363 = vmul.f32 %v1362, %v1336
        %v1364 = vsel %vm860, %v1363, 0.0
        %1365 = vadd.xlane.f32.xlu0 %v1364
        %v1366 = vpop.xlane.xlu0 %1365
        %1367 = vset.pattern.permute.xlu0 43
        %1368 = vperm.xlu0 %1367, %v788
        %v1369 = vpop.permute.xlu0 %1368
        %vm1371 = vcmp.eq.f32.partialorder %v795, %v1369
        %v1372 = vsel %vm1371, 1, 0
        %v1373 = vcvt.s32.f32 %v1372
        %1374 = vset.pattern.permute.xlu0 43
        %1375 = vperm.xlu0 %1374, %v792
        %v1376 = vpop.permute.xlu0 %1375
        %v1378 = vmul.f32 %v1376, %v1373
        %1379 = vset.pattern.permute.xlu0 43
        %1380 = vperm.xlu0 %1379, %v789
        %v1381 = vpop.permute.xlu0 %1380
        %vm1383 = vcmp.eq.f32.partialorder %v795, %v1381
        %v1384 = vsel %vm1383, 1, 0
        %v1385 = vcvt.s32.f32 %v1384
        %1386 = vset.pattern.permute.xlu0 43
        %1387 = vperm.xlu0 %1386, %v791
        %v1388 = vpop.permute.xlu0 %1387
        %v1390 = vmul.f32 %v1388, %v1385
        %v1391 = vadd.f32 %v1378, %v1390
        %v1392 = vmul.f32 %v1391, %v1336
        %v1393 = vsel %vm860, %v1392, 0.0
        %1394 = vadd.xlane.f32.xlu0 %v1393
        %v1395 = vpop.xlane.xlu0 %1394
        %1396 = vset.pattern.permute.xlu0 44
        %1397 = vperm.xlu0 %1396, %v788
        %v1398 = vpop.permute.xlu0 %1397
        %vm1400 = vcmp.eq.f32.partialorder %v795, %v1398
        %v1401 = vsel %vm1400, 1, 0
        %v1402 = vcvt.s32.f32 %v1401
        %1403 = vset.pattern.permute.xlu0 44
        %1404 = vperm.xlu0 %1403, %v792
        %v1405 = vpop.permute.xlu0 %1404
        %v1407 = vmul.f32 %v1405, %v1402
        %1408 = vset.pattern.permute.xlu0 44
        %1409 = vperm.xlu0 %1408, %v789
        %v1410 = vpop.permute.xlu0 %1409
        %vm1412 = vcmp.eq.f32.partialorder %v795, %v1410
        %v1413 = vsel %vm1412, 1, 0
        %v1414 = vcvt.s32.f32 %v1413
        %1415 = vset.pattern.permute.xlu0 44
        %1416 = vperm.xlu0 %1415, %v791
        %v1417 = vpop.permute.xlu0 %1416
        %v1419 = vmul.f32 %v1417, %v1414
        %v1420 = vadd.f32 %v1407, %v1419
        %v1421 = vmul.f32 %v1420, %v1336
        %v1422 = vsel %vm860, %v1421, 0.0
        %1423 = vadd.xlane.f32.xlu0 %v1422
        %v1424 = vpop.xlane.xlu0 %1423
        %1425 = vset.pattern.permute.xlu0 45
        %1426 = vperm.xlu0 %1425, %v788
        %v1427 = vpop.permute.xlu0 %1426
        %vm1429 = vcmp.eq.f32.partialorder %v795, %v1427
        %v1430 = vsel %vm1429, 1, 0
        %v1431 = vcvt.s32.f32 %v1430
        %1432 = vset.pattern.permute.xlu0 45
        %1433 = vperm.xlu0 %1432, %v792
        %v1434 = vpop.permute.xlu0 %1433
        %v1436 = vmul.f32 %v1434, %v1431
        %1437 = vset.pattern.permute.xlu0 45
        %1438 = vperm.xlu0 %1437, %v789
        %v1439 = vpop.permute.xlu0 %1438
        %vm1441 = vcmp.eq.f32.partialorder %v795, %v1439
        %v1442 = vsel %vm1441, 1, 0
        %v1443 = vcvt.s32.f32 %v1442
        %1444 = vset.pattern.permute.xlu0 45
        %1445 = vperm.xlu0 %1444, %v791
        %v1446 = vpop.permute.xlu0 %1445
        %v1448 = vmul.f32 %v1446, %v1443
        %v1449 = vadd.f32 %v1436, %v1448
        %v1450 = vmul.f32 %v1449, %v1336
        %v1451 = vsel %vm860, %v1450, 0.0
        %1452 = vadd.xlane.f32.xlu0 %v1451
        %v1453 = vpop.xlane.xlu0 %1452
        %1454 = vset.pattern.permute.xlu0 46
        %1455 = vperm.xlu0 %1454, %v788
        %v1456 = vpop.permute.xlu0 %1455
        %vm1458 = vcmp.eq.f32.partialorder %v795, %v1456
        %v1459 = vsel %vm1458, 1, 0
        %v1460 = vcvt.s32.f32 %v1459
        %1461 = vset.pattern.permute.xlu0 46
        %1462 = vperm.xlu0 %1461, %v792
        %v1463 = vpop.permute.xlu0 %1462
        %v1465 = vmul.f32 %v1463, %v1460
        %1466 = vset.pattern.permute.xlu0 46
        %1467 = vperm.xlu0 %1466, %v789
        %v1468 = vpop.permute.xlu0 %1467
        %vm1470 = vcmp.eq.f32.partialorder %v795, %v1468
        %v1471 = vsel %vm1470, 1, 0
        %v1472 = vcvt.s32.f32 %v1471
        %1473 = vset.pattern.permute.xlu0 46
        %1474 = vperm.xlu0 %1473, %v791
        %v1475 = vpop.permute.xlu0 %1474
        %v1477 = vmul.f32 %v1475, %v1472
        %v1478 = vadd.f32 %v1465, %v1477
        %v1479 = vmul.f32 %v1478, %v1336
        %v1480 = vsel %vm860, %v1479, 0.0
        %1481 = vadd.xlane.f32.xlu0 %v1480
        %v1482 = vpop.xlane.xlu0 %1481
        %v1483 = vsel %vm980, %v1366, %v1395
        %v1484 = vsel %vm982, %v1483, %v1424
        %v1485 = vsel %vm984, %v1484, %v1453
        %v1486 = vsel %vm986, %v1485, %v1482
        %v1487 = vsel %vm988, %v1486, -inf
        %1488 = vmax.xlane.f32.xlu0 %v1487
        %v1489 = vpop.xlane.xlu0 %1488
        %v1490 = vsub.f32 %v1486, %v1489
        %v1491 = vmul.f32 %v1490, 1.442695
        %v1492 = vpow.pop %v1491
        %v1493 = vsel %vm988, %v1492, 0.0
        %1494 = vadd.xlane.f32.xlu0 %v1493
        %v1495 = vpop.xlane.xlu0 %1494
        %v1496 = vrcp.pop %v1495
        %v1497 = vmul.f32 %v1492, %v1496
        %1499 = vset.pattern.permute.xlu0 0
        %1500 = vperm.xlu0 %1499, %v1497
        %v1501 = vpop.permute.xlu0 %1500
        %v1503 = vmul.f32 %v1501, %v1362
        %1504 = vset.pattern.permute.xlu0 1
        %1505 = vperm.xlu0 %1504, %v1497
        %v1506 = vpop.permute.xlu0 %1505
        %v1508 = vmul.f32 %v1506, %v1391
        %v1509 = vadd.f32 %v1503, %v1508
        %1510 = vset.pattern.permute.xlu0 2
        %1511 = vperm.xlu0 %1510, %v1497
        %v1512 = vpop.permute.xlu0 %1511
        %v1514 = vmul.f32 %v1512, %v1420
        %v1515 = vadd.f32 %v1509, %v1514
        %1516 = vset.pattern.permute.xlu0 3
        %1517 = vperm.xlu0 %1516, %v1497
        %v1518 = vpop.permute.xlu0 %1517
        %v1520 = vmul.f32 %v1518, %v1449
        %v1521 = vadd.f32 %v1515, %v1520
        %1522 = vset.pattern.permute.xlu0 4
        %1523 = vperm.xlu0 %1522, %v1497
        %v1524 = vpop.permute.xlu0 %1523
        %v1526 = vmul.f32 %v1524, %v1478
        %v1527 = vadd.f32 %v1521, %v1526
        %1528 = vrot.lane.b32.xlu0 %v798, 112
        %v1529 = vpop.permute.xlu0 %1528
        %1530 = vrot.lane.b32.xlu0 %v799, 112
        %v1531 = vpop.permute.xlu0 %1530
        %v1535 = vsel %vm860, %v1527, 0
        %1537 = vmatpush.msra.mxu0 0.0
        %1538 = vmatpush.msra.mxu0 0.0
        %1539 = vmatpush.msra.mxu0 0.0
        %1540 = vmatpush.msra.mxu0 0.0
        %1541 = vmatpush.msra.mxu0 0.0
        %1542 = vmatpush.msra.mxu0 0.0
        %1543 = vmatpush.msra.mxu0 0.0
        %1544 = vmatpush.msra.mxu0 0.0
        %1545 = vmatpush.msra.mxu0 0.0
        %1546 = vmatpush.msra.mxu0 0.0
        %1547 = vmatpush.msra.mxu0 0.0
        %1548 = vmatpush.msra.mxu0 0.0
        %1549 = vmatpush.msra.mxu0 0.0
        %1550 = vmatpush.msra.mxu0 0.0
        %1551 = vmatpush.msra.mxu0 %v1531
        %1552 = vmatpush.msra.mxu0 %v1529
        %1553 = vmatmul.f32.gmra.mxu0 %v1535
        %v1554 = vpop.f32.mrf.mxu0
        %v1555 = vadd.f32 0.0, %v1554
        %1556 = vdwg.mxu0
        %1557 = vrot.lane.b32.xlu0 %v772, 104
        %v1558 = vpop.permute.xlu0 %1557
        %1559 = vrot.lane.b32.xlu0 %v796, 104
        %v1560 = vpop.permute.xlu0 %1559
        %1561 = vrot.lane.b32.xlu0 %v797, 104
        %v1562 = vpop.permute.xlu0 %1561
        %v1563 = vsel %vm800, %v1558, 0
        %v1565 = vsel %vm800, %v1560, 0
        %v1567 = vsel %vm800, %v1562, 0
        %1569 = vmatpush.xpose.msra.mxu0 0.0
        %1570 = vmatpush.xpose.msra.mxu0 0.0
        %1571 = vmatpush.xpose.msra.mxu0 0.0
        %1572 = vmatpush.xpose.msra.mxu0 0.0
        %1573 = vmatpush.xpose.msra.mxu0 0.0
        %1574 = vmatpush.xpose.msra.mxu0 0.0
        %1575 = vmatpush.xpose.msra.mxu0 0.0
        %1576 = vmatpush.xpose.msra.mxu0 0.0
        %1577 = vmatpush.xpose.msra.mxu0 0.0
        %1578 = vmatpush.xpose.msra.mxu0 0.0
        %1579 = vmatpush.xpose.msra.mxu0 0.0
        %1580 = vmatpush.xpose.msra.mxu0 0.0
        %1581 = vmatpush.xpose.msra.mxu0 0.0
        %1582 = vmatpush.xpose.msra.mxu0 0.0
        %1583 = vmatpush.xpose.msra.mxu0 %v1567
        %1584 = vmatpush.xpose.msra.mxu0 %v1565
        %1585 = vmatmul.f32.gmra.mxu0 %v1563
        %v1586 = vpop.f32.mrf.mxu0
        %v1587 = vadd.f32 0.0, %v1586
        %1588 = vdwg.mxu0
        %1589 = vset.pattern.permute.xlu0 47
        %1590 = vperm.xlu0 %1589, %v788
        %v1591 = vpop.permute.xlu0 %1590
        %vm1593 = vcmp.eq.f32.partialorder %v795, %v1591
        %v1594 = vsel %vm1593, 1, 0
        %v1595 = vcvt.s32.f32 %v1594
        %1596 = vset.pattern.permute.xlu0 47
        %1597 = vperm.xlu0 %1596, %v792
        %v1598 = vpop.permute.xlu0 %1597
        %v1600 = vmul.f32 %v1598, %v1595
        %1601 = vset.pattern.permute.xlu0 47
        %1602 = vperm.xlu0 %1601, %v789
        %v1603 = vpop.permute.xlu0 %1602
        %vm1605 = vcmp.eq.f32.partialorder %v795, %v1603
        %v1606 = vsel %vm1605, 1, 0
        %v1607 = vcvt.s32.f32 %v1606
        %1608 = vset.pattern.permute.xlu0 47
        %1609 = vperm.xlu0 %1608, %v791
        %v1610 = vpop.permute.xlu0 %1609
        %v1612 = vmul.f32 %v1610, %v1607
        %v1613 = vadd.f32 %v1600, %v1612
        %v1614 = vmul.f32 %v1613, %v1587
        %v1615 = vsel %vm860, %v1614, 0.0
        %1616 = vadd.xlane.f32.xlu0 %v1615
        %v1617 = vpop.xlane.xlu0 %1616
        %1618 = vset.pattern.permute.xlu0 48
        %1619 = vperm.xlu0 %1618, %v788
        %v1620 = vpop.permute.xlu0 %1619
        %vm1622 = vcmp.eq.f32.partialorder %v795, %v1620
        %v1623 = vsel %vm1622, 1, 0
        %v1624 = vcvt.s32.f32 %v1623
        %1625 = vset.pattern.permute.xlu0 48
        %1626 = vperm.xlu0 %1625, %v792
        %v1627 = vpop.permute.xlu0 %1626
        %v1629 = vmul.f32 %v1627, %v1624
        %1630 = vset.pattern.permute.xlu0 48
        %1631 = vperm.xlu0 %1630, %v789
        %v1632 = vpop.permute.xlu0 %1631
        %vm1634 = vcmp.eq.f32.partialorder %v795, %v1632
        %v1635 = vsel %vm1634, 1, 0
        %v1636 = vcvt.s32.f32 %v1635
        %1637 = vset.pattern.permute.xlu0 48
        %1638 = vperm.xlu0 %1637, %v791
        %v1639 = vpop.permute.xlu0 %1638
        %v1641 = vmul.f32 %v1639, %v1636
        %v1642 = vadd.f32 %v1629, %v1641
        %v1643 = vmul.f32 %v1642, %v1587
        %v1644 = vsel %vm860, %v1643, 0.0
        %1645 = vadd.xlane.f32.xlu0 %v1644
        %v1646 = vpop.xlane.xlu0 %1645
        %1647 = vset.pattern.permute.xlu0 49
        %1648 = vperm.xlu0 %1647, %v788
        %v1649 = vpop.permute.xlu0 %1648
        %vm1651 = vcmp.eq.f32.partialorder %v795, %v1649
        %v1652 = vsel %vm1651, 1, 0
        %v1653 = vcvt.s32.f32 %v1652
        %1654 = vset.pattern.permute.xlu0 49
        %1655 = vperm.xlu0 %1654, %v792
        %v1656 = vpop.permute.xlu0 %1655
        %v1658 = vmul.f32 %v1656, %v1653
        %1659 = vset.pattern.permute.xlu0 49
        %1660 = vperm.xlu0 %1659, %v789
        %v1661 = vpop.permute.xlu0 %1660
        %vm1663 = vcmp.eq.f32.partialorder %v795, %v1661
        %v1664 = vsel %vm1663, 1, 0
        %v1665 = vcvt.s32.f32 %v1664
        %1666 = vset.pattern.permute.xlu0 49
        %1667 = vperm.xlu0 %1666, %v791
        %v1668 = vpop.permute.xlu0 %1667
        %v1670 = vmul.f32 %v1668, %v1665
        %v1671 = vadd.f32 %v1658, %v1670
        %v1672 = vmul.f32 %v1671, %v1587
        %v1673 = vsel %vm860, %v1672, 0.0
        %1674 = vadd.xlane.f32.xlu0 %v1673
        %v1675 = vpop.xlane.xlu0 %1674
        %1676 = vset.pattern.permute.xlu0 50
        %1677 = vperm.xlu0 %1676, %v788
        %v1678 = vpop.permute.xlu0 %1677
        %vm1680 = vcmp.eq.f32.partialorder %v795, %v1678
        %v1681 = vsel %vm1680, 1, 0
        %v1682 = vcvt.s32.f32 %v1681
        %1683 = vset.pattern.permute.xlu0 50
        %1684 = vperm.xlu0 %1683, %v792
        %v1685 = vpop.permute.xlu0 %1684
        %v1687 = vmul.f32 %v1685, %v1682
        %1688 = vset.pattern.permute.xlu0 50
        %1689 = vperm.xlu0 %1688, %v789
        %v1690 = vpop.permute.xlu0 %1689
        %vm1692 = vcmp.eq.f32.partialorder %v795, %v1690
        %v1693 = vsel %vm1692, 1, 0
        %v1694 = vcvt.s32.f32 %v1693
        %1695 = vset.pattern.permute.xlu0 50
        %1696 = vperm.xlu0 %1695, %v791
        %v1697 = vpop.permute.xlu0 %1696
        %v1699 = vmul.f32 %v1697, %v1694
        %v1700 = vadd.f32 %v1687, %v1699
        %v1701 = vmul.f32 %v1700, %v1587
        %v1702 = vsel %vm860, %v1701, 0.0
        %1703 = vadd.xlane.f32.xlu0 %v1702
        %v1704 = vpop.xlane.xlu0 %1703
        %1705 = vset.pattern.permute.xlu0 51
        %1706 = vperm.xlu0 %1705, %v788
        %v1707 = vpop.permute.xlu0 %1706
        %vm1709 = vcmp.eq.f32.partialorder %v795, %v1707
        %v1710 = vsel %vm1709, 1, 0
        %v1711 = vcvt.s32.f32 %v1710
        %1712 = vset.pattern.permute.xlu0 51
        %1713 = vperm.xlu0 %1712, %v792
        %v1714 = vpop.permute.xlu0 %1713
        %v1716 = vmul.f32 %v1714, %v1711
        %1717 = vset.pattern.permute.xlu0 51
        %1718 = vperm.xlu0 %1717, %v789
        %v1719 = vpop.permute.xlu0 %1718
        %vm1721 = vcmp.eq.f32.partialorder %v795, %v1719
        %v1722 = vsel %vm1721, 1, 0
        %v1723 = vcvt.s32.f32 %v1722
        %1724 = vset.pattern.permute.xlu0 51
        %1725 = vperm.xlu0 %1724, %v791
        %v1726 = vpop.permute.xlu0 %1725
        %v1728 = vmul.f32 %v1726, %v1723
        %v1729 = vadd.f32 %v1716, %v1728
        %v1730 = vmul.f32 %v1729, %v1587
        %v1731 = vsel %vm860, %v1730, 0.0
        %1732 = vadd.xlane.f32.xlu0 %v1731
        %v1733 = vpop.xlane.xlu0 %1732
        %v1734 = vsel %vm980, %v1617, %v1646
        %v1735 = vsel %vm982, %v1734, %v1675
        %v1736 = vsel %vm984, %v1735, %v1704
        %v1737 = vsel %vm986, %v1736, %v1733
        %v1738 = vsel %vm988, %v1737, -inf
        %1739 = vmax.xlane.f32.xlu0 %v1738
        %v1740 = vpop.xlane.xlu0 %1739
        %v1741 = vsub.f32 %v1737, %v1740
        %v1742 = vmul.f32 %v1741, 1.442695
        %v1743 = vpow.pop %v1742
        %v1744 = vsel %vm988, %v1743, 0.0
        %1745 = vadd.xlane.f32.xlu0 %v1744
        %v1746 = vpop.xlane.xlu0 %1745
        %v1747 = vrcp.pop %v1746
        %v1748 = vmul.f32 %v1743, %v1747
        %1750 = vset.pattern.permute.xlu0 0
        %1751 = vperm.xlu0 %1750, %v1748
        %v1752 = vpop.permute.xlu0 %1751
        %v1754 = vmul.f32 %v1752, %v1613
        %1755 = vset.pattern.permute.xlu0 1
        %1756 = vperm.xlu0 %1755, %v1748
        %v1757 = vpop.permute.xlu0 %1756
        %v1759 = vmul.f32 %v1757, %v1642
        %v1760 = vadd.f32 %v1754, %v1759
        %1761 = vset.pattern.permute.xlu0 2
        %1762 = vperm.xlu0 %1761, %v1748
        %v1763 = vpop.permute.xlu0 %1762
        %v1765 = vmul.f32 %v1763, %v1671
        %v1766 = vadd.f32 %v1760, %v1765
        %1767 = vset.pattern.permute.xlu0 3
        %1768 = vperm.xlu0 %1767, %v1748
        %v1769 = vpop.permute.xlu0 %1768
        %v1771 = vmul.f32 %v1769, %v1700
        %v1772 = vadd.f32 %v1766, %v1771
        %1773 = vset.pattern.permute.xlu0 4
        %1774 = vperm.xlu0 %1773, %v1748
        %v1775 = vpop.permute.xlu0 %1774
        %v1777 = vmul.f32 %v1775, %v1729
        %v1778 = vadd.f32 %v1772, %v1777
        %1779 = vrot.lane.b32.xlu0 %v798, 104
        %v1780 = vpop.permute.xlu0 %1779
        %1781 = vrot.lane.b32.xlu0 %v799, 104
        %v1782 = vpop.permute.xlu0 %1781
        %v1786 = vsel %vm860, %v1778, 0
        %1788 = vmatpush.msra.mxu0 0.0
        %1789 = vmatpush.msra.mxu0 0.0
        %1790 = vmatpush.msra.mxu0 0.0
        %1791 = vmatpush.msra.mxu0 0.0
        %1792 = vmatpush.msra.mxu0 0.0
        %1793 = vmatpush.msra.mxu0 0.0
        %1794 = vmatpush.msra.mxu0 0.0
        %1795 = vmatpush.msra.mxu0 0.0
        %1796 = vmatpush.msra.mxu0 0.0
        %1797 = vmatpush.msra.mxu0 0.0
        %1798 = vmatpush.msra.mxu0 0.0
        %1799 = vmatpush.msra.mxu0 0.0
        %1800 = vmatpush.msra.mxu0 0.0
        %1801 = vmatpush.msra.mxu0 0.0
        %1802 = vmatpush.msra.mxu0 %v1782
        %1803 = vmatpush.msra.mxu0 %v1780
        %1804 = vmatmul.f32.gmra.mxu0 %v1786
        %v1805 = vpop.f32.mrf.mxu0
        %v1806 = vadd.f32 0.0, %v1805
        %1807 = vdwg.mxu0
        %1809 = vrot.lane.b32.xlu0 %v1304, 8
        %v1810 = vpop.permute.xlu0 %1809
        %1813 = vrot.lane.b32.xlu0 %v1555, 16
        %v1814 = vpop.permute.xlu0 %1813
        %1817 = vrot.lane.b32.xlu0 %v1806, 24
        %v1818 = vpop.permute.xlu0 %1817
        %v1820 = vsel %vm800, %v1051, %v1810
        %v1821 = vsel %vm860, %v1820, %v1814
        %vm1822 = vcmask 195584
        %v1823 = vsel %vm1822, %v1821, %v1818
        %v1824 = vld [vmem:[#allocation19] sm:$0xff]
        %v1825 = vld [vmem:[#allocation19 + $0x8] sm:$0xff]
        %v1826 = vld [vmem:[#allocation19 + $0x10] sm:$0xff]
        %v1827 = vld [vmem:[#allocation19 + $0x18] sm:$0xff]
        %v1828 = vld [vmem:[%s12] sm:$0x1]
        %v1830 = vperm.slane %v1828, 0
        %v1833 = vsel %vm748, %v1823, 0
        %1835 = vmatpush.msra.mxu0 0.0
        %1836 = vmatpush.msra.mxu0 0.0
        %1837 = vmatpush.msra.mxu0 0.0
        %1838 = vmatpush.msra.mxu0 0.0
        %1839 = vmatpush.msra.mxu0 0.0
        %1840 = vmatpush.msra.mxu0 0.0
        %1841 = vmatpush.msra.mxu0 0.0
        %1842 = vmatpush.msra.mxu0 0.0
        %1843 = vmatpush.msra.mxu0 0.0
        %1844 = vmatpush.msra.mxu0 0.0
        %1845 = vmatpush.msra.mxu0 0.0
        %1846 = vmatpush.msra.mxu0 0.0
        %1847 = vmatpush.msra.mxu0 %v1827
        %1848 = vmatpush.msra.mxu0 %v1826
        %1849 = vmatpush.msra.mxu0 %v1825
        %1850 = vmatpush.msra.mxu0 %v1824
        %1851 = vmatmul.f32.gmra.mxu0 %v1833
        %v1852 = vpop.f32.mrf.mxu0
        %v1853 = vadd.f32 %v1830, %v1852
        %1854 = vdwg.mxu0
        %1855 = vst.msk [vmem:[%s649] sm:$0xff] %vm748, %v1853
        %s1856 = sand.u32 %s349, 1
        %s1857 = scalar_lea.sflag [#allocation6], %s1856
        %s1858 = sand.u32 %s349, 1
        %s1859 = smul.addr %s1858, 8
        %s1860 = scalar_lea.vmem [#allocation20], %s1859
        // Predicated region
        $region113: #{tpu_custom_call.1} parent=71 // pred_check
          %p1861 = pneg %p359
        $region114: #{tpu_custom_call.1} parent=71 // pred_check_branch
          %1863 = sbr.rel (%p1861) target = $region116
        $region115: #{tpu_custom_call.1} parent=71 // pred_region
          %1865 = vsyncadd %s1857, 0
          %s1866 = smul.addr %s41, 2
          %s1867 = sadd.s32 %s42, %s1866
          %s1868 = smul.addr %s1867, 8
          %s1869 = scalar_lea.hbm %s13, %s1868
          %s1871 = sshll.u32 %s1860, 4
          %s1872 = int_to_ptr.vmem [resolvable:$true] %s1871
          %s1873 = sshll.u32 %s1869, 4
          %s1874 = int_to_ptr.hbm [resolvable:$true] %s1873
          %1876 = dma.vmem_to_hbm [thread:$0]  %s1872, 128, %s1874, %s1857
        $region116: #{tpu_custom_call.1} parent=71 // pred_fallthru
          _
      $region72: #{tpu_custom_call.1} parent=5 // pred_fallthru
        _
      %p1877 = scmp.le.s32.totalorder 2, %s32
      // Predicated region
      $region117: #{tpu_custom_call.1} parent=5 // pred_check
        %p1878 = pneg %p1877
      $region118: #{tpu_custom_call.1} parent=5 // pred_check_branch
        %1880 = sbr.rel (%p1878) target = $region120
      $region119: #{tpu_custom_call.1} parent=5 // pred_region
        %s1881 = ssub.s32 %s32, 2
        // Predicated region
        $region121: #{tpu_custom_call.1} parent=119 // pred_check
          %p1882 = pneg %p365
        $region122: #{tpu_custom_call.1} parent=119 // pred_check_branch
          %1884 = sbr.rel (%p1882) target = $region124
        $region123: #{tpu_custom_call.1} parent=119 // pred_region
          %s1885 = sand.u32 %s350, 1
          %s1886 = scalar_lea.sflag [#allocation6], %s1885
          %s1887 = sand.u32 %s350, 1
          %s1888 = smul.addr %s1887, 8
          %s1889 = scalar_lea.vmem [#allocation20], %s1888
          %1891 = dma.done %s1886, 128
        $region124: #{tpu_custom_call.1} parent=119 // pred_fallthru
          _
      $region120: #{tpu_custom_call.1} parent=5 // pred_fallthru
        _
    $region6: #{tpu_custom_call.1} parent=1 // loop_footer
      %s36 = sadd.s32 1, %s32
    $region7: #{tpu_custom_call.1} parent=1 // loop_footer_branch
      %31 = sbr.rel target = $region3
    $region8: #{tpu_custom_call.1} parent=1 // loop_exit
      _
    %1892 = vsyncpa [#allocation5], 1
    %s1893 = scalar_lea.sflag [#allocation5], 1
    %1894 = vsyncpa %s1893, 1
    %1895 = vsyncpa [#allocation12], 1
    %s1896 = scalar_lea.sflag [#allocation12], 1
    %1897 = vsyncpa %s1896, 1
    %1898 = vsyncpa [#allocation15], 1
    %1899 = vsyncpa [#allocation18], 1
    %1900 = vsyncpa [#allocation6], 1
    %s1901 = scalar_lea.sflag [#allocation6], 1
    %1902 = vsyncpa %s1901, 1
    %1903 = vsyncpa [#allocation7], 1
    %s1904 = scalar_lea.sflag [#allocation7], 1
    %1905 = vsyncpa %s1904, 1
    %1906 = vsyncpa [#allocation9], 1

</llo_original>
